<compile_context>
chip_gen: v5e
topology: v5e:2x2
jax: 0.10.0
libtpu: 0.0.40
codegen_flags: <defaults>
</compile_context>

<pallas_src>
import numpy as np
import jax
import jax.numpy as jnp
from jax.experimental import pallas as pl
from jax.experimental.pallas import tpu as pltpu

EIGEN_CLUSTER = 4


def _round_up(x: int, m: int) -> int:
    return ((x + m - 1) // m) * m


def _resize_matrix(in_size: int, out_size: int) -> np.ndarray:
    """Row-interpolation matrix matching F.interpolate(bilinear, align_corners=False)."""
    scale = in_size / out_size
    R = np.zeros((out_size, in_size), dtype=np.float32)
    for o in range(out_size):
        src = (o + 0.5) * scale - 0.5
        src = max(src, 0.0)
        i0 = min(int(np.floor(src)), in_size - 1)
        i1 = min(i0 + 1, in_size - 1)
        w1 = src - i0
        R[o, i0] += 1.0 - w1
        R[o, i1] += w1
    return R.astype(np.float32)


def _eigen_lap_kernel(code_ref, pix_ref, lap_ref):
    # code_ref: (1, N, Cp)  token codes for one batch element
    # pix_ref : (1, N, Pp)  resized pixels pre-scaled by 10/255 (sigma folded)
    # lap_ref : (1, N, N)   normalized Laplacian, written at its final size
    code = code_ref[0]                                   # (N, Cp) f32
    pix = pix_ref[0]                                     # (N, Pp) f32, = 10*img/255
    n = code.shape[0]

    # --- adj = relu(code @ code^T), scaled by 1/max (scalar reciprocal) ------
    adj = jax.lax.dot_general(code, code, (((1,), (1,)), ((), ())),
                              preferred_element_type=jnp.float32)   # (N, N)
    adj = jnp.maximum(adj, 0.0)
    # Clamp avoids NaN when ReLU zeroes the whole matrix (reference would NaN).
    inv_m = 1.0 / jnp.maximum(jnp.max(adj), 1e-12)

    # --- color affinity: exp(-||p_i - p_j||^2 / (2 * 0.1^2)) -----------------
    # With p' = 10 * p the exponent is  gram' - 0.5*(|p'_i|^2 + |p'_j|^2);
    # the -0.5 is folded into the (1, Pp) ones-matmul (idle MXU) and the
    # small (N, 1) column, so no full-(N,N) rescale is needed.  Clamping the
    # exponent at 0 replaces the reference's clamp(dist, 0, inf).
    gram = jax.lax.dot_general(pix, pix, (((1,), (1,)), ((), ())),
                               preferred_element_type=jnp.float32)  # (N, N)
    pix2 = pix * pix                                                # (N, Pp)
    sq_col = jnp.sum(pix2, axis=-1, keepdims=True) * jnp.float32(-0.5)  # (N, 1)
    neg_half = jnp.full((1, pix.shape[1]), -0.5, jnp.float32)
    sq_row = jax.lax.dot_general(neg_half, pix2, (((1,), (1,)), ((), ())),
                                 preferred_element_type=jnp.float32)    # (1, N)
    expo = jnp.minimum(gram + sq_col + sq_row, 0.0)
    aff = jnp.exp(expo)                                             # EUP
    # Reference also divides aff by its max == exp(0) == 1 -> skipped (no-op).

    # --- combined affinity, degrees, fused normalized Laplacian --------------
    W = aff + adj * inv_m                                           # symmetric (to fp)
    d_col = jnp.sum(W, axis=-1, keepdims=True)                      # (N, 1) row sums
    ones_n = jnp.ones((1, n), jnp.float32)
    d_row = jax.lax.dot_general(ones_n, W, (((1,), (0,)), ((), ())),
                                preferred_element_type=jnp.float32)  # (1, N) col sums
    inv_c = jax.lax.rsqrt(jnp.where(d_col < 1e-12, 1.0, d_col))
    inv_r = jax.lax.rsqrt(jnp.where(d_row < 1e-12, 1.0, d_row))

    # D^-1/2 (D - W) D^-1/2 == I - D^-1/2 W D^-1/2 (with the reference's clamp).
    # Diagonal from small iotas + broadcast compare + select (3 full-tile ops
    # instead of the 5 of two full iotas + cmp + cast + sub).
    row_ids = jax.lax.broadcasted_iota(jnp.int32, (n, 1), 0)
    col_ids = jax.lax.broadcasted_iota(jnp.int32, (1, n), 1)
    diag = jnp.where(row_ids == col_ids, 1.0, 0.0)                  # (N, N)
    lap_ref[0] = diag - (W * inv_c) * inv_r


def _laplacian_pallas(code_f, pix_f):
    B, N, Cp = code_f.shape
    _, _, Pp = pix_f.shape
    # Np-dependent VMEM limit (perf review): ~16 MiB covers the 14x14 case,
    # ~34 MiB the 28x28 case; never request more than needed so v7x (64 MiB
    # physical) keeps scheduling headroom.
    n_sub = _round_up(N, 8)
    n_lane = _round_up(N, 128)
    tile_bytes = n_sub * n_lane * 4
    vmem_limit = int(min(60 * 1024 * 1024, max(16 * 1024 * 1024, 12 * tile_bytes)))
    return pl.pallas_call(
        _eigen_lap_kernel,
        out_shape=jax.ShapeDtypeStruct((B, N, N), jnp.float32),
        grid=(B,),
        in_specs=[
            pl.BlockSpec((1, N, Cp), lambda b: (b, 0, 0)),
            pl.BlockSpec((1, N, Pp), lambda b: (b, 0, 0)),
        ],
        out_specs=pl.BlockSpec((1, N, N), lambda b: (b, 0, 0)),
        compiler_params=pltpu.CompilerParams(
            # One batch element per grid step; megacore splits over B (v6e/v7x).
            # TODO(synk): for B < 2 on v7x, a two-pass row-tiled grid would
            # keep the second TensorCore busy; not needed for these shapes.
            dimension_semantics=("parallel",),
            vmem_limit_bytes=vmem_limit,
        ),
    )(code_f, pix_f)


def eigen_loss_forward(img, feat, code, eigen_cluster=EIGEN_CLUSTER):
    """Mirrors EigenLoss.forward(img, feat, code) -> eigenvectors (B, N, K)."""
    # F.normalize(feat) in the reference does not influence the returned
    # eigenvectors; only feat.shape[1] is used (to pick the resize size).
    B, N, C = code.shape
    size = 14 if feat.shape[1] == 196 else 28
    assert size * size == N, "code token count must equal resize size**2"

    _, Cimg, H, Wd = img.shape
    # Fold the reference's /255 and the sigma=0.1 (i.e. a factor 10) into the
    # row-resize matrix so the kernel never rescales pixels.
    Ry = jnp.asarray(_resize_matrix(H, size) * np.float32(10.0 / 255.0))
    Rx = jnp.asarray(_resize_matrix(Wd, size))
    img_rs = jnp.einsum('oh,bchw,pw->bopc', Ry, img.astype(jnp.float32), Rx)
    pixels = img_rs.reshape(B, N, Cimg)                  # (B, N, 3) scaled by 10/255

    # Channel pads only to a multiple of 8 (zero pad is exact: padded channels
    # contribute nothing to the Gram matrices or squared norms).  Tokens are
    # NOT padded: full-extent blocks keep the (8,128) rule satisfied and the
    # kernel writes the Laplacian at its final (N, N) size.
    Cp = _round_up(C, 8)
    Pp = _round_up(Cimg, 8)
    code_f = code.astype(jnp.float32)
    if Cp != C:
        code_f = jnp.pad(code_f, ((0, 0), (0, 0), (0, Cp - C)))
    if Pp != Cimg:
        pixels = jnp.pad(pixels, ((0, 0), (0, 0), (0, Pp - Cimg)))

    lap = _laplacian_pallas(code_f, pixels)              # (B, N, N)

    # TODO(synk): torch.linalg.eigh has no Pallas equivalent; computed with jnp.linalg.eigh.
    _, evecs = jnp.linalg.eigh(lap)
    ev = evecs[:, :, :eigen_cluster].astype(jnp.float32)

    # Per-batch sign flip: negate if 0.5 < mean(ev > 0) < 1.0
    frac = jnp.mean((ev > 0).astype(jnp.float32), axis=(1, 2))
    flip = (frac > 0.5) & (frac < 1.0)
    ev = jnp.where(flip[:, None, None], -ev, ev)
    return ev


if __name__ == "__main__":
    key = jax.random.PRNGKey(0)
    k_img, k_feat, k_code = jax.random.split(key, 3)

    B, N, C_code, D_feat = 2, 196, 32, 64     # N = 196 tokens -> resize to 14x14
    img = jax.random.uniform(k_img, (B, 3, 32, 32), jnp.float32) * 255.0   # NCHW
    feat = jax.random.normal(k_feat, (B, N, D_feat), jnp.float32)
    code = jax.random.normal(k_code, (B, N, C_code), jnp.float32)

    ev = eigen_loss_forward(img, feat, code, eigen_cluster=EIGEN_CLUSTER)
    ev = jax.block_until_ready(ev)
    assert ev.shape == (B, N, EIGEN_CLUSTER) and ev.dtype == jnp.float32
    assert bool(jnp.all(jnp.isfinite(ev)))
    print("KERNEL_OK")
</pallas_src>

<mosaic_0001>
module attributes {stable_mosaic.version = 11 : i64} {
  func.func @_eigen_lap_kernel(%arg0: i32, %arg1: memref<1x196x32xf32, #tpu.memory_space<vmem>>, %arg2: memref<1x196x8xf32, #tpu.memory_space<vmem>>, %arg3: memref<1x196x196xf32, #tpu.memory_space<vmem>>) attributes {dimension_semantics = [#tpu.dimension_semantics<parallel>], iteration_bounds = array<i64: 2>, scalar_prefetch = 0 : i64, scratch_operands = 0 : i64, tpu.core_type = #tpu.core_type<tc>, window_params = [{transform_indices = @transform_0, window_bounds = array<i64: 1, 196, 32>}, {transform_indices = @transform_1, window_bounds = array<i64: 1, 196, 8>}, {transform_indices = @transform_2, window_bounds = array<i64: 1, 196, 196>}]} {
    %c0 = arith.constant 0 : index
    %c0_0 = arith.constant 0 : index
    %c0_1 = arith.constant 0 : index
    %0 = vector.load %arg1[%c0, %c0_0, %c0_1] : memref<1x196x32xf32, #tpu.memory_space<vmem>>, vector<1x196x32xf32>
    %1 = vector.shape_cast %0 : vector<1x196x32xf32> to vector<196x32xf32>
    %c0_2 = arith.constant 0 : index
    %c0_3 = arith.constant 0 : index
    %c0_4 = arith.constant 0 : index
    %2 = vector.load %arg2[%c0_2, %c0_3, %c0_4] : memref<1x196x8xf32, #tpu.memory_space<vmem>>, vector<1x196x8xf32>
    %3 = vector.shape_cast %2 : vector<1x196x8xf32> to vector<196x8xf32>
    %cst = arith.constant dense<0.000000e+00> : vector<196x196xf32>
    %4 = tpu.matmul %1, %1, %cst {dimension_numbers = #tpu.dot_dimension_numbers<[1], [1], [0], [0], [0, 0, 1, 0], [], []>} : vector<196x32xf32>, vector<196x32xf32>, vector<196x196xf32> -> vector<196x196xf32>
    %cst_5 = arith.constant 0.000000e+00 : f32
    %5 = vector.broadcast %cst_5 : f32 to vector<196x196xf32>
    %6 = arith.maximumf %4, %5 : vector<196x196xf32>
    %7 = vector.shape_cast %6 : vector<196x196xf32> to vector<1x196x196xf32>
    %cst_6 = arith.constant dense<0xFF800000> : vector<1xf32>
    %8 = vector.multi_reduction <maximumf>, %7, %cst_6 [1, 2] : vector<1x196x196xf32> to vector<1xf32>
    %9 = vector.shape_cast %8 : vector<1xf32> to vector<1x1x1xf32>
    %10 = vector.extract %9[0, 0, 0] : f32 from vector<1x1x1xf32>
    %cst_7 = arith.constant 9.99999996E-13 : f32
    %11 = arith.maximumf %10, %cst_7 : f32
    %cst_8 = arith.constant 1.000000e+00 : f32
    %12 = arith.divf %cst_8, %11 : f32
    %cst_9 = arith.constant dense<0.000000e+00> : vector<196x196xf32>
    %13 = tpu.matmul %3, %3, %cst_9 {dimension_numbers = #tpu.dot_dimension_numbers<[1], [1], [0], [0], [0, 0, 1, 0], [], []>} : vector<196x8xf32>, vector<196x8xf32>, vector<196x196xf32> -> vector<196x196xf32>
    %14 = arith.mulf %3, %3 : vector<196x8xf32>
    %cst_10 = arith.constant dense<0.000000e+00> : vector<196xf32>
    %15 = vector.multi_reduction <add>, %14, %cst_10 [1] : vector<196x8xf32> to vector<196xf32>
    %16 = vector.shape_cast %15 : vector<196xf32> to vector<196x1xf32>
    %cst_11 = arith.constant -5.000000e-01 : f32
    %17 = vector.broadcast %cst_11 : f32 to vector<196x1xf32>
    %18 = arith.mulf %16, %17 : vector<196x1xf32>
    %cst_12 = arith.constant -5.000000e-01 : f32
    %19 = vector.broadcast %cst_12 : f32 to vector<1x8xf32>
    %cst_13 = arith.constant dense<0.000000e+00> : vector<1x196xf32>
    %20 = tpu.matmul %19, %14, %cst_13 {dimension_numbers = #tpu.dot_dimension_numbers<[1], [1], [0], [0], [0, 0, 1, 0], [], []>} : vector<1x8xf32>, vector<196x8xf32>, vector<1x196xf32> -> vector<1x196xf32>
    %21 = vector.broadcast %18 : vector<196x1xf32> to vector<196x196xf32>
    %22 = arith.addf %13, %21 : vector<196x196xf32>
    %23 = vector.broadcast %20 : vector<1x196xf32> to vector<196x196xf32>
    %24 = arith.addf %22, %23 : vector<196x196xf32>
    %cst_14 = arith.constant 0.000000e+00 : f32
    %25 = vector.broadcast %cst_14 : f32 to vector<196x196xf32>
    %26 = arith.minimumf %24, %25 : vector<196x196xf32>
    %27 = math.exp %26 : vector<196x196xf32>
    %28 = vector.broadcast %12 : f32 to vector<196x196xf32>
    %29 = arith.mulf %6, %28 : vector<196x196xf32>
    %30 = arith.addf %27, %29 : vector<196x196xf32>
    %cst_15 = arith.constant dense<0.000000e+00> : vector<196xf32>
    %31 = vector.multi_reduction <add>, %30, %cst_15 [1] : vector<196x196xf32> to vector<196xf32>
    %32 = vector.shape_cast %31 : vector<196xf32> to vector<196x1xf32>
    %cst_16 = arith.constant 1.000000e+00 : f32
    %33 = vector.broadcast %cst_16 : f32 to vector<1x196xf32>
    %cst_17 = arith.constant dense<0.000000e+00> : vector<1x196xf32>
    %34 = tpu.matmul %33, %30, %cst_17 {dimension_numbers = #tpu.dot_dimension_numbers<[1], [0], [0], [1], [0, 0, 1, 1], [], []>} : vector<1x196xf32>, vector<196x196xf32>, vector<1x196xf32> -> vector<1x196xf32>
    %cst_18 = arith.constant 9.99999996E-13 : f32
    %35 = vector.broadcast %cst_18 : f32 to vector<196x1xf32>
    %36 = arith.cmpf olt, %32, %35 : vector<196x1xf32>
    %cst_19 = arith.constant 1.000000e+00 : f32
    %37 = vector.broadcast %cst_19 : f32 to vector<196x1xf32>
    %38 = arith.select %36, %37, %32 : vector<196x1xi1>, vector<196x1xf32>
    %39 = math.rsqrt %38 : vector<196x1xf32>
    %cst_20 = arith.constant 9.99999996E-13 : f32
    %40 = vector.broadcast %cst_20 : f32 to vector<1x196xf32>
    %41 = arith.cmpf olt, %34, %40 : vector<1x196xf32>
    %cst_21 = arith.constant 1.000000e+00 : f32
    %42 = vector.broadcast %cst_21 : f32 to vector<1x196xf32>
    %43 = arith.select %41, %42, %34 : vector<1x196xi1>, vector<1x196xf32>
    %44 = math.rsqrt %43 : vector<1x196xf32>
    %45 = tpu.iota {dimensions = array<i32: 0>} : vector<196x1xi32>
    %46 = tpu.iota {dimensions = array<i32: 1>} : vector<1x196xi32>
    %47 = vector.broadcast %45 : vector<196x1xi32> to vector<196x196xi32>
    %48 = vector.broadcast %46 : vector<1x196xi32> to vector<196x196xi32>
    %49 = arith.cmpi eq, %47, %48 : vector<196x196xi32>
    %cst_22 = arith.constant 1.000000e+00 : f32
    %cst_23 = arith.constant 0.000000e+00 : f32
    %50 = vector.broadcast %cst_22 : f32 to vector<196x196xf32>
    %51 = vector.broadcast %cst_23 : f32 to vector<196x196xf32>
    %52 = arith.select %49, %50, %51 : vector<196x196xi1>, vector<196x196xf32>
    %53 = vector.broadcast %39 : vector<196x1xf32> to vector<196x196xf32>
    %54 = arith.mulf %30, %53 : vector<196x196xf32>
    %55 = vector.broadcast %44 : vector<1x196xf32> to vector<196x196xf32>
    %56 = arith.mulf %54, %55 : vector<196x196xf32>
    %57 = arith.subf %52, %56 : vector<196x196xf32>
    %c0_24 = arith.constant 0 : index
    %c0_25 = arith.constant 0 : index
    %c0_26 = arith.constant 0 : index
    %58 = vector.load %arg3[%c0_24, %c0_25, %c0_26] : memref<1x196x196xf32, #tpu.memory_space<vmem>>, vector<1x196x196xf32>
    %59 = vector.shape_cast %58 : vector<1x196x196xf32> to vector<196x196xf32>
    %60 = vector.shape_cast %57 : vector<196x196xf32> to vector<1x196x196xf32>
    tpu.vector_store %arg3[%c0_24, %c0_25, %c0_26], %60 {strides = array<i32>} : memref<1x196x196xf32, #tpu.memory_space<vmem>>, vector<1x196x196xf32>,
    return
  }
  func.func @transform_0(%arg0: i32) -> (i32, i32, i32) {
    %c0_i32 = arith.constant 0 : i32
    %c0_i32_0 = arith.constant 0 : i32
    %c0_i32_1 = arith.constant 0 : i32
    return %arg0, %c0_i32, %c0_i32_0 : i32, i32, i32
  }
  func.func @transform_1(%arg0: i32) -> (i32, i32, i32) {
    %c0_i32 = arith.constant 0 : i32
    %c0_i32_0 = arith.constant 0 : i32
    %c0_i32_1 = arith.constant 0 : i32
    return %arg0, %c0_i32, %c0_i32_0 : i32, i32, i32
  }
  func.func @transform_2(%arg0: i32) -> (i32, i32, i32) {
    %c0_i32 = arith.constant 0 : i32
    %c0_i32_0 = arith.constant 0 : i32
    %c0_i32_1 = arith.constant 0 : i32
    return %arg0, %c0_i32, %c0_i32_0 : i32, i32, i32
  }
}

</mosaic_0001>

<llo_original>
// kernel: tpu_custom_call.1
$region0: #{tpu_custom_call.1}
  #allocation0 [shape = 'u32[]', space=smem, size = 0x4, offset = 0x4, fixed_abs, tag = 'smem constant byte address 0x4 - core index']
  #allocation1 [shape = 'u32[72,128]{1,0:T(1,128)}', space=vmem, size = 0x9000, scoped, tag = 'internal scratch']
  %s0 = inlined_call_operand.vmem [shape: f32[2,196,32], index: 0, kind: input, shape index: {}]
  %s1 = inlined_call_operand.vmem [shape: f32[2,196,8], index: 1, kind: input, shape index: {}]
  %s2 = inlined_call_operand.vmem [shape: f32[2,196,196], index: 2, kind: output, shape index: {}]
  %s3 = sld [smem:[#allocation0]]
  $region41: #{tpu_custom_call.1} parent=0
    _
  %s5 = ssub.s32 1, %s3
  %s6 = scalar_select 0, %s5, %s3
  loop: start=0, step=1, limit=4
  $region2: #{tpu_custom_call.1} parent=0 // loop_pre_header
    _
  $region3: #{tpu_custom_call.1} parent=0 // loop_header
    %s8 = sphi 0, %s12
    %p9 = scmp.ge.s32.totalorder %s8, 4
    %s18 = sphi 0, %s20
    %s21 = sphi 0, %s18
    %s22 = sphi 0, %s21
    %s38 = sphi 0, %s22
    %s44 = sphi 0, %s46
    %s47 = sphi 0, %s44
    %s48 = sphi 0, %s47
    %s64 = sphi 0, %s48
    %s70 = sphi 0, %s72
    %s73 = sphi 0, %s70
    %s74 = sphi 0, %s73
    %s90 = sphi 0, %s74
  $region4: #{tpu_custom_call.1} parent=0 // loop_header_branch
    %11 = sbr.rel (%p9) target = $region8
  $region5: #{tpu_custom_call.1} parent=0 // loop_body
    %s13 = ssub.s32 %s8, 1
    %s14 = ssub.s32 %s8, 2
    %s15 = sadd.s32 %s8, 1
    %s16 = ssub.s32 %s8, %s15
    %p17 = scmp.eq.s32.totalorder %s16, 0
    %s19 = sadd.s32 %s18, 1
    %s20 = scalar_select %p17, %s18, %s19
    %p23 = pneg %p17
    %p24 = scmp.eq.s32.totalorder %s8, 1
    %p25 = por %p23, %p24
    %p26 = scmp.ne.s32.totalorder %s18, %s21
    %p27 = scmp.eq.s32.totalorder %s8, 0
    %p28 = por %p26, %p27
    %p29 = scmp.ne.s32.totalorder %s18, %s21
    %p30 = scmp.eq.s32.totalorder %s13, 1
    %p31 = por %p29, %p30
    %p32 = scmp.ne.s32.totalorder %s21, %s22
    %p33 = scmp.eq.s32.totalorder %s13, 0
    %p34 = por %p32, %p33
    %p35 = scmp.ne.s32.totalorder %s21, %s22
    %p36 = scmp.eq.s32.totalorder %s14, 1
    %p37 = por %p35, %p36
    %p39 = scmp.ne.s32.totalorder %s22, %s38
    %p40 = scmp.eq.s32.totalorder %s14, 0
    %p41 = por %p39, %p40
    %s42 = ssub.s32 %s8, %s15
    %p43 = scmp.eq.s32.totalorder %s42, 0
    %s45 = sadd.s32 %s44, 1
    %s46 = scalar_select %p43, %s44, %s45
    %p49 = pneg %p43
    %p50 = scmp.eq.s32.totalorder %s8, 1
    %p51 = por %p49, %p50
    %p52 = scmp.ne.s32.totalorder %s44, %s47
    %p53 = scmp.eq.s32.totalorder %s8, 0
    %p54 = por %p52, %p53
    %p55 = scmp.ne.s32.totalorder %s44, %s47
    %p56 = scmp.eq.s32.totalorder %s13, 1
    %p57 = por %p55, %p56
    %p58 = scmp.ne.s32.totalorder %s47, %s48
    %p59 = scmp.eq.s32.totalorder %s13, 0
    %p60 = por %p58, %p59
    %p61 = scmp.ne.s32.totalorder %s47, %s48
    %p62 = scmp.eq.s32.totalorder %s14, 1
    %p63 = por %p61, %p62
    %p65 = scmp.ne.s32.totalorder %s48, %s64
    %p66 = scmp.eq.s32.totalorder %s14, 0
    %p67 = por %p65, %p66
    %s68 = ssub.s32 %s8, %s15
    %p69 = scmp.eq.s32.totalorder %s68, 0
    %s71 = sadd.s32 %s70, 1
    %s72 = scalar_select %p69, %s70, %s71
    %p75 = pneg %p69
    %p76 = scmp.eq.s32.totalorder %s8, 1
    %p77 = por %p75, %p76
    %p78 = scmp.ne.s32.totalorder %s70, %s73
    %p79 = scmp.eq.s32.totalorder %s8, 0
    %p80 = por %p78, %p79
    %p81 = scmp.ne.s32.totalorder %s70, %s73
    %p82 = scmp.eq.s32.totalorder %s13, 1
    %p83 = por %p81, %p82
    %p84 = scmp.ne.s32.totalorder %s73, %s74
    %p85 = scmp.eq.s32.totalorder %s13, 0
    %p86 = por %p84, %p85
    %p87 = scmp.ne.s32.totalorder %s73, %s74
    %p88 = scmp.eq.s32.totalorder %s14, 1
    %p89 = por %p87, %p88
    %p91 = scmp.ne.s32.totalorder %s74, %s90
    %p92 = scmp.eq.s32.totalorder %s14, 0
    %p93 = por %p91, %p92
    %p94 = scmp.le.s32.totalorder 1, %s8
    %p95 = scmp.lt.s32.totalorder %s8, 3
    %p96 = pnand %p94, %p95
    %p97 = pneg %p96
    // Predicated region
    $region9: #{tpu_custom_call.1} parent=5 // pred_check
      _
    $region10: #{tpu_custom_call.1} parent=5 // pred_check_branch
      %99 = sbr.rel (%p96) target = $region12
    $region11: #{tpu_custom_call.1} parent=5 // pred_region
      %s100 = ssub.s32 %s8, 1
    $region12: #{tpu_custom_call.1} parent=5 // pred_fallthru
      _
    %p101 = scmp.lt.s32.totalorder %s8, 2
    // Predicated region
    $region13: #{tpu_custom_call.1} parent=5 // pred_check
      %p102 = pneg %p101
    $region14: #{tpu_custom_call.1} parent=5 // pred_check_branch
      %104 = sbr.rel (%p102) target = $region16
    $region15: #{tpu_custom_call.1} parent=5 // pred_region
      // Predicated region
      $region17: #{tpu_custom_call.1} parent=15 // pred_check
        %p105 = pneg %p28
      $region18: #{tpu_custom_call.1} parent=15 // pred_check_branch
        %107 = sbr.rel (%p105) target = $region20
      $region19: #{tpu_custom_call.1} parent=15 // pred_region
        %p108 = scmp.lt.s32.totalorder %s8, 1
        %s109 = scalar_select %p108, %s8, 1
        %s110 = smul.addr %s109, 25
        %s111 = smul.addr %s110, 8
        %s112 = scalar_lea.vmem %s0, %s111
      $region20: #{tpu_custom_call.1} parent=15 // pred_fallthru
        _
      // Predicated region
      $region21: #{tpu_custom_call.1} parent=15 // pred_check
        %p113 = pneg %p54
      $region22: #{tpu_custom_call.1} parent=15 // pred_check_branch
        %115 = sbr.rel (%p113) target = $region24
      $region23: #{tpu_custom_call.1} parent=15 // pred_region
        %p116 = scmp.lt.s32.totalorder %s8, 1
        %s117 = scalar_select %p116, %s8, 1
        %s118 = smul.addr %s117, 25
        %s119 = smul.addr %s118, 8
        %s120 = scalar_lea.vmem %s1, %s119
      $region24: #{tpu_custom_call.1} parent=15 // pred_fallthru
        _
    $region16: #{tpu_custom_call.1} parent=5 // pred_fallthru
      _
    %p121 = scmp.le.s32.totalorder 1, %s8
    %p122 = scmp.lt.s32.totalorder %s8, 3
    %p123 = pnand %p121, %p122
    %p124 = pneg %p123
    // Predicated region
    $region25: #{tpu_custom_call.1} parent=5 // pred_check
      _
    $region26: #{tpu_custom_call.1} parent=5 // pred_check_branch
      %126 = sbr.rel (%p123) target = $region28
    $region27: #{tpu_custom_call.1} parent=5 // pred_region
      %s127 = ssub.s32 %s8, 1
      %p128 = scmp.lt.s32.totalorder %s13, 1
      %s129 = scalar_select %p128, %s13, 1
      %s130 = smul.addr %s129, 25
      %s131 = smul.addr %s130, 8
      %s132 = scalar_lea.vmem %s0, %s131
      %p133 = pneg %p34
      %p134 = pneg %p31
      %p135 = scmp.lt.s32.totalorder %s13, 1
      %s136 = scalar_select %p135, %s13, 1
      %s137 = smul.addr %s136, 25
      %s138 = smul.addr %s137, 8
      %s139 = scalar_lea.vmem %s1, %s138
      %p140 = pneg %p60
      %p141 = pneg %p57
      %p142 = pneg %p86
      %p143 = pneg %p83
      %p144 = scmp.lt.s32.totalorder %s13, 1
      %s145 = scalar_select %p144, %s13, 1
      %s146 = smul.addr %s145, 50
      %s147 = smul.addr %s146, 8
      %s148 = scalar_lea.vmem %s2, %s147
      %p149 = scmp.lt.s32.totalorder %s13, 1
      %s150 = scalar_select %p149, %s13, 1
      %s151 = smul.addr %s150, 25
      %s152 = smul.addr %s151, 8
      %s153 = scalar_lea.vmem %s0, %s152
      %p154 = scmp.lt.s32.totalorder %s13, 1
      %s155 = scalar_select %p154, %s13, 1
      %s156 = smul.addr %s155, 25
      %s157 = smul.addr %s156, 8
      %s158 = scalar_lea.vmem %s1, %s157
      %p159 = scmp.lt.s32.totalorder %s13, 1
      %s160 = scalar_select %p159, %s13, 1
      %s161 = smul.addr %s160, 50
      %s162 = smul.addr %s161, 8
      %s163 = scalar_lea.vmem %s2, %s162
      %v164 = vld [vmem:[%s153] sm:$0xff]
      %v165 = vld [vmem:[%s153 + $0x8] sm:$0xff]
      %v166 = vld [vmem:[%s153 + $0x10] sm:$0xff]
      %v167 = vld [vmem:[%s153 + $0x18] sm:$0xff]
      %v168 = vld [vmem:[%s153 + $0x20] sm:$0xff]
      %v169 = vld [vmem:[%s153 + $0x28] sm:$0xff]
      %v170 = vld [vmem:[%s153 + $0x30] sm:$0xff]
      %v171 = vld [vmem:[%s153 + $0x38] sm:$0xff]
      %v172 = vld [vmem:[%s153 + $0x40] sm:$0xff]
      %v173 = vld [vmem:[%s153 + $0x48] sm:$0xff]
      %v174 = vld [vmem:[%s153 + $0x50] sm:$0xff]
      %v175 = vld [vmem:[%s153 + $0x58] sm:$0xff]
      %v176 = vld [vmem:[%s153 + $0x60] sm:$0xff]
      %v177 = vld [vmem:[%s153 + $0x68] sm:$0xff]
      %v178 = vld [vmem:[%s153 + $0x70] sm:$0xff]
      %v179 = vld [vmem:[%s153 + $0x78] sm:$0xff]
      %v180 = vld [vmem:[%s153 + $0x80] sm:$0xff]
      %v181 = vld [vmem:[%s153 + $0x88] sm:$0xff]
      %v182 = vld [vmem:[%s153 + $0x90] sm:$0xff]
      %v183 = vld [vmem:[%s153 + $0x98] sm:$0xff]
      %v184 = vld [vmem:[%s153 + $0xa0] sm:$0xff]
      %v185 = vld [vmem:[%s153 + $0xa8] sm:$0xff]
      %v186 = vld [vmem:[%s153 + $0xb0] sm:$0xff]
      %v187 = vld [vmem:[%s153 + $0xb8] sm:$0xff]
      %v188 = vld [vmem:[%s153 + $0xc0] sm:$0xf]
      %v189 = vld [vmem:[%s158] sm:$0xff]
      %v190 = vld [vmem:[%s158 + $0x8] sm:$0xff]
      %v191 = vld [vmem:[%s158 + $0x10] sm:$0xff]
      %v192 = vld [vmem:[%s158 + $0x18] sm:$0xff]
      %v193 = vld [vmem:[%s158 + $0x20] sm:$0xff]
      %v194 = vld [vmem:[%s158 + $0x28] sm:$0xff]
      %v195 = vld [vmem:[%s158 + $0x30] sm:$0xff]
      %v196 = vld [vmem:[%s158 + $0x38] sm:$0xff]
      %v197 = vld [vmem:[%s158 + $0x40] sm:$0xff]
      %v198 = vld [vmem:[%s158 + $0x48] sm:$0xff]
      %v199 = vld [vmem:[%s158 + $0x50] sm:$0xff]
      %v200 = vld [vmem:[%s158 + $0x58] sm:$0xff]
      %v201 = vld [vmem:[%s158 + $0x60] sm:$0xff]
      %v202 = vld [vmem:[%s158 + $0x68] sm:$0xff]
      %v203 = vld [vmem:[%s158 + $0x70] sm:$0xff]
      %v204 = vld [vmem:[%s158 + $0x78] sm:$0xff]
      %v205 = vld [vmem:[%s158 + $0x80] sm:$0xff]
      %v206 = vld [vmem:[%s158 + $0x88] sm:$0xff]
      %v207 = vld [vmem:[%s158 + $0x90] sm:$0xff]
      %v208 = vld [vmem:[%s158 + $0x98] sm:$0xff]
      %v209 = vld [vmem:[%s158 + $0xa0] sm:$0xff]
      %v210 = vld [vmem:[%s158 + $0xa8] sm:$0xff]
      %v211 = vld [vmem:[%s158 + $0xb0] sm:$0xff]
      %v212 = vld [vmem:[%s158 + $0xb8] sm:$0xff]
      %v213 = vld [vmem:[%s158 + $0xc0] sm:$0xf]
      %vm214 = vcmask 261120
      %v216 = vsel %vm214, %v164, 0
      %v219 = vsel %vm214, %v165, 0
      %v222 = vsel %vm214, %v166, 0
      %v225 = vsel %vm214, %v167, 0
      %v228 = vsel %vm214, %v168, 0
      %v231 = vsel %vm214, %v169, 0
      %v234 = vsel %vm214, %v170, 0
      %v237 = vsel %vm214, %v171, 0
      %v240 = vsel %vm214, %v172, 0
      %v243 = vsel %vm214, %v173, 0
      %v246 = vsel %vm214, %v174, 0
      %v249 = vsel %vm214, %v175, 0
      %v252 = vsel %vm214, %v176, 0
      %v255 = vsel %vm214, %v177, 0
      %v258 = vsel %vm214, %v178, 0
      %v261 = vsel %vm214, %v179, 0
      %v264 = vsel %vm214, %v180, 0
      %v267 = vsel %vm214, %v181, 0
      %v270 = vsel %vm214, %v182, 0
      %v273 = vsel %vm214, %v183, 0
      %v276 = vsel %vm214, %v184, 0
      %v279 = vsel %vm214, %v185, 0
      %v282 = vsel %vm214, %v186, 0
      %v285 = vsel %vm214, %v187, 0
      %v288 = vsel %vm214, %v188, 0
      %290 = vmatpush.xpose.msra.mxu0 %v261
      %291 = vmatpush.xpose.msra.mxu0 %v258
      %292 = vmatpush.xpose.msra.mxu0 %v255
      %293 = vmatpush.xpose.msra.mxu0 %v252
      %294 = vmatpush.xpose.msra.mxu0 %v249
      %295 = vmatpush.xpose.msra.mxu0 %v246
      %296 = vmatpush.xpose.msra.mxu0 %v243
      %297 = vmatpush.xpose.msra.mxu0 %v240
      %298 = vmatpush.xpose.msra.mxu0 %v237
      %299 = vmatpush.xpose.msra.mxu0 %v234
      %300 = vmatpush.xpose.msra.mxu0 %v231
      %301 = vmatpush.xpose.msra.mxu0 %v228
      %302 = vmatpush.xpose.msra.mxu0 %v225
      %303 = vmatpush.xpose.msra.mxu0 %v222
      %304 = vmatpush.xpose.msra.mxu0 %v219
      %305 = vmatpush.xpose.msra.mxu0 %v216
      %306 = vmatmul.f32.gmra.mxu0 %v216
      %v307 = vpop.f32.mrf.mxu0
      %v308 = vadd.f32 0.0, %v307
      %309 = vmatmul.f32.gmra.mxu0 %v219
      %v310 = vpop.f32.mrf.mxu0
      %v311 = vadd.f32 0.0, %v310
      %312 = vmatmul.f32.gmra.mxu0 %v222
      %v313 = vpop.f32.mrf.mxu0
      %v314 = vadd.f32 0.0, %v313
      %315 = vmatmul.f32.gmra.mxu0 %v225
      %v316 = vpop.f32.mrf.mxu0
      %v317 = vadd.f32 0.0, %v316
      %318 = vmatmul.f32.gmra.mxu0 %v228
      %v319 = vpop.f32.mrf.mxu0
      %v320 = vadd.f32 0.0, %v319
      %321 = vmatmul.f32.gmra.mxu0 %v231
      %v322 = vpop.f32.mrf.mxu0
      %v323 = vadd.f32 0.0, %v322
      %324 = vmatmul.f32.gmra.mxu0 %v234
      %v325 = vpop.f32.mrf.mxu0
      %v326 = vadd.f32 0.0, %v325
      %327 = vmatmul.f32.gmra.mxu0 %v237
      %v328 = vpop.f32.mrf.mxu0
      %v329 = vadd.f32 0.0, %v328
      %330 = vmatmul.f32.gmra.mxu0 %v240
      %v331 = vpop.f32.mrf.mxu0
      %v332 = vadd.f32 0.0, %v331
      %333 = vmatmul.f32.gmra.mxu0 %v243
      %v334 = vpop.f32.mrf.mxu0
      %v335 = vadd.f32 0.0, %v334
      %336 = vmatmul.f32.gmra.mxu0 %v246
      %v337 = vpop.f32.mrf.mxu0
      %v338 = vadd.f32 0.0, %v337
      %339 = vmatmul.f32.gmra.mxu0 %v249
      %v340 = vpop.f32.mrf.mxu0
      %v341 = vadd.f32 0.0, %v340
      %342 = vmatmul.f32.gmra.mxu0 %v252
      %v343 = vpop.f32.mrf.mxu0
      %v344 = vadd.f32 0.0, %v343
      %345 = vmatmul.f32.gmra.mxu0 %v255
      %v346 = vpop.f32.mrf.mxu0
      %v347 = vadd.f32 0.0, %v346
      %348 = vmatmul.f32.gmra.mxu0 %v258
      %v349 = vpop.f32.mrf.mxu0
      %v350 = vadd.f32 0.0, %v349
      %351 = vmatmul.f32.gmra.mxu0 %v261
      %v352 = vpop.f32.mrf.mxu0
      %v353 = vadd.f32 0.0, %v352
      %354 = vmatmul.f32.gmra.mxu0 %v264
      %v355 = vpop.f32.mrf.mxu0
      %v356 = vadd.f32 0.0, %v355
      %357 = vmatmul.f32.gmra.mxu0 %v267
      %v358 = vpop.f32.mrf.mxu0
      %v359 = vadd.f32 0.0, %v358
      %360 = vmatmul.f32.gmra.mxu0 %v270
      %v361 = vpop.f32.mrf.mxu0
      %v362 = vadd.f32 0.0, %v361
      %363 = vmatmul.f32.gmra.mxu0 %v273
      %v364 = vpop.f32.mrf.mxu0
      %v365 = vadd.f32 0.0, %v364
      %366 = vmatmul.f32.gmra.mxu0 %v276
      %v367 = vpop.f32.mrf.mxu0
      %v368 = vadd.f32 0.0, %v367
      %369 = vmatmul.f32.gmra.mxu0 %v279
      %v370 = vpop.f32.mrf.mxu0
      %v371 = vadd.f32 0.0, %v370
      %372 = vmatmul.f32.gmra.mxu0 %v282
      %v373 = vpop.f32.mrf.mxu0
      %v374 = vadd.f32 0.0, %v373
      %375 = vmatmul.f32.gmra.mxu0 %v285
      %v376 = vpop.f32.mrf.mxu0
      %v377 = vadd.f32 0.0, %v376
      %378 = vmatmul.f32.gmra.mxu0 %v288
      %v379 = vpop.f32.mrf.mxu0
      %v380 = vadd.f32 0.0, %v379
      %381 = vdwg.mxu0
      %382 = vmatpush.xpose.msra.mxu0 0.0
      %383 = vmatpush.xpose.msra.mxu0 0.0
      %384 = vmatpush.xpose.msra.mxu0 0.0
      %385 = vmatpush.xpose.msra.mxu0 0.0
      %386 = vmatpush.xpose.msra.mxu0 0.0
      %387 = vmatpush.xpose.msra.mxu0 0.0
      %388 = vmatpush.xpose.msra.mxu0 0.0
      %389 = vmatpush.xpose.msra.mxu0 %v288
      %390 = vmatpush.xpose.msra.mxu0 %v285
      %391 = vmatpush.xpose.msra.mxu0 %v282
      %392 = vmatpush.xpose.msra.mxu0 %v279
      %393 = vmatpush.xpose.msra.mxu0 %v276
      %394 = vmatpush.xpose.msra.mxu0 %v273
      %395 = vmatpush.xpose.msra.mxu0 %v270
      %396 = vmatpush.xpose.msra.mxu0 %v267
      %397 = vmatpush.xpose.msra.mxu0 %v264
      %398 = vmatmul.f32.gmra.mxu0 %v216
      %v399 = vpop.f32.mrf.mxu0
      %v400 = vadd.f32 0.0, %v399
      %401 = vmatmul.f32.gmra.mxu0 %v219
      %v402 = vpop.f32.mrf.mxu0
      %v403 = vadd.f32 0.0, %v402
      %404 = vmatmul.f32.gmra.mxu0 %v222
      %v405 = vpop.f32.mrf.mxu0
      %v406 = vadd.f32 0.0, %v405
      %407 = vmatmul.f32.gmra.mxu0 %v225
      %v408 = vpop.f32.mrf.mxu0
      %v409 = vadd.f32 0.0, %v408
      %410 = vmatmul.f32.gmra.mxu0 %v228
      %v411 = vpop.f32.mrf.mxu0
      %v412 = vadd.f32 0.0, %v411
      %413 = vmatmul.f32.gmra.mxu0 %v231
      %v414 = vpop.f32.mrf.mxu0
      %v415 = vadd.f32 0.0, %v414
      %416 = vmatmul.f32.gmra.mxu0 %v234
      %v417 = vpop.f32.mrf.mxu0
      %v418 = vadd.f32 0.0, %v417
      %419 = vmatmul.f32.gmra.mxu0 %v237
      %v420 = vpop.f32.mrf.mxu0
      %v421 = vadd.f32 0.0, %v420
      %422 = vmatmul.f32.gmra.mxu0 %v240
      %v423 = vpop.f32.mrf.mxu0
      %v424 = vadd.f32 0.0, %v423
      %425 = vmatmul.f32.gmra.mxu0 %v243
      %v426 = vpop.f32.mrf.mxu0
      %v427 = vadd.f32 0.0, %v426
      %428 = vmatmul.f32.gmra.mxu0 %v246
      %v429 = vpop.f32.mrf.mxu0
      %v430 = vadd.f32 0.0, %v429
      %431 = vmatmul.f32.gmra.mxu0 %v249
      %v432 = vpop.f32.mrf.mxu0
      %v433 = vadd.f32 0.0, %v432
      %434 = vmatmul.f32.gmra.mxu0 %v252
      %v435 = vpop.f32.mrf.mxu0
      %v436 = vadd.f32 0.0, %v435
      %437 = vmatmul.f32.gmra.mxu0 %v255
      %v438 = vpop.f32.mrf.mxu0
      %v439 = vadd.f32 0.0, %v438
      %440 = vmatmul.f32.gmra.mxu0 %v258
      %v441 = vpop.f32.mrf.mxu0
      %v442 = vadd.f32 0.0, %v441
      %443 = vmatmul.f32.gmra.mxu0 %v261
      %v444 = vpop.f32.mrf.mxu0
      %v445 = vadd.f32 0.0, %v444
      %446 = vmatmul.f32.gmra.mxu0 %v264
      %v447 = vpop.f32.mrf.mxu0
      %v448 = vadd.f32 0.0, %v447
      %449 = vmatmul.f32.gmra.mxu0 %v267
      %v450 = vpop.f32.mrf.mxu0
      %v451 = vadd.f32 0.0, %v450
      %452 = vmatmul.f32.gmra.mxu0 %v270
      %v453 = vpop.f32.mrf.mxu0
      %v454 = vadd.f32 0.0, %v453
      %455 = vmatmul.f32.gmra.mxu0 %v273
      %v456 = vpop.f32.mrf.mxu0
      %v457 = vadd.f32 0.0, %v456
      %458 = vmatmul.f32.gmra.mxu0 %v276
      %v459 = vpop.f32.mrf.mxu0
      %v460 = vadd.f32 0.0, %v459
      %461 = vmatmul.f32.gmra.mxu0 %v279
      %v462 = vpop.f32.mrf.mxu0
      %v463 = vadd.f32 0.0, %v462
      %464 = vmatmul.f32.gmra.mxu0 %v282
      %v465 = vpop.f32.mrf.mxu0
      %v466 = vadd.f32 0.0, %v465
      %467 = vmatmul.f32.gmra.mxu0 %v285
      %v468 = vpop.f32.mrf.mxu0
      %v469 = vadd.f32 0.0, %v468
      %470 = vmatmul.f32.gmra.mxu0 %v288
      %v471 = vpop.f32.mrf.mxu0
      %v472 = vadd.f32 0.0, %v471
      %473 = vdwg.mxu0
      %v474 = vmax.f32 %v308, 0.0
      %v475 = vmax.f32 %v400, 0.0
      %v476 = vmax.f32 %v311, 0.0
      %v477 = vmax.f32 %v403, 0.0
      %v478 = vmax.f32 %v314, 0.0
      %v479 = vmax.f32 %v406, 0.0
      %v480 = vmax.f32 %v317, 0.0
      %v481 = vmax.f32 %v409, 0.0
      %v482 = vmax.f32 %v320, 0.0
      %v483 = vmax.f32 %v412, 0.0
      %v484 = vmax.f32 %v323, 0.0
      %v485 = vmax.f32 %v415, 0.0
      %v486 = vmax.f32 %v326, 0.0
      %v487 = vmax.f32 %v418, 0.0
      %v488 = vmax.f32 %v329, 0.0
      %v489 = vmax.f32 %v421, 0.0
      %v490 = vmax.f32 %v332, 0.0
      %v491 = vmax.f32 %v424, 0.0
      %v492 = vmax.f32 %v335, 0.0
      %v493 = vmax.f32 %v427, 0.0
      %v494 = vmax.f32 %v338, 0.0
      %v495 = vmax.f32 %v430, 0.0
      %v496 = vmax.f32 %v341, 0.0
      %v497 = vmax.f32 %v433, 0.0
      %v498 = vmax.f32 %v344, 0.0
      %v499 = vmax.f32 %v436, 0.0
      %v500 = vmax.f32 %v347, 0.0
      %v501 = vmax.f32 %v439, 0.0
      %v502 = vmax.f32 %v350, 0.0
      %v503 = vmax.f32 %v442, 0.0
      %v504 = vmax.f32 %v353, 0.0
      %v505 = vmax.f32 %v445, 0.0
      %v506 = vmax.f32 %v356, 0.0
      %v507 = vmax.f32 %v448, 0.0
      %v508 = vmax.f32 %v359, 0.0
      %v509 = vmax.f32 %v451, 0.0
      %v510 = vmax.f32 %v362, 0.0
      %v511 = vmax.f32 %v454, 0.0
      %v512 = vmax.f32 %v365, 0.0
      %v513 = vmax.f32 %v457, 0.0
      %v514 = vmax.f32 %v368, 0.0
      %v515 = vmax.f32 %v460, 0.0
      %v516 = vmax.f32 %v371, 0.0
      %v517 = vmax.f32 %v463, 0.0
      %v518 = vmax.f32 %v374, 0.0
      %v519 = vmax.f32 %v466, 0.0
      %v520 = vmax.f32 %v377, 0.0
      %v521 = vmax.f32 %v469, 0.0
      %v522 = vmax.f32 %v380, 0.0
      %v523 = vmax.f32 %v472, 0.0
      %vm524 = vcmask 556032
      %v525 = vsel %vm524, %v475, -inf
      %v526 = vsel %vm524, %v477, -inf
      %v527 = vmax.f32 %v474, %v478
      %v528 = vsel %vm524, %v479, -inf
      %v529 = vmax.f32 %v525, %v528
      %v530 = vmax.f32 %v476, %v480
      %v531 = vsel %vm524, %v481, -inf
      %v532 = vmax.f32 %v526, %v531
      %v533 = vmax.f32 %v527, %v482
      %v534 = vsel %vm524, %v483, -inf
      %v535 = vmax.f32 %v529, %v534
      %v536 = vmax.f32 %v530, %v484
      %v537 = vsel %vm524, %v485, -inf
      %v538 = vmax.f32 %v532, %v537
      %v539 = vmax.f32 %v533, %v486
      %v540 = vsel %vm524, %v487, -inf
      %v541 = vmax.f32 %v535, %v540
      %v542 = vmax.f32 %v536, %v488
      %v543 = vsel %vm524, %v489, -inf
      %v544 = vmax.f32 %v538, %v543
      %v545 = vmax.f32 %v539, %v490
      %v546 = vsel %vm524, %v491, -inf
      %v547 = vmax.f32 %v541, %v546
      %v548 = vmax.f32 %v542, %v492
      %v549 = vsel %vm524, %v493, -inf
      %v550 = vmax.f32 %v544, %v549
      %v551 = vmax.f32 %v545, %v494
      %v552 = vsel %vm524, %v495, -inf
      %v553 = vmax.f32 %v547, %v552
      %v554 = vmax.f32 %v548, %v496
      %v555 = vsel %vm524, %v497, -inf
      %v556 = vmax.f32 %v550, %v555
      %v557 = vmax.f32 %v551, %v498
      %v558 = vsel %vm524, %v499, -inf
      %v559 = vmax.f32 %v553, %v558
      %v560 = vmax.f32 %v554, %v500
      %v561 = vsel %vm524, %v501, -inf
      %v562 = vmax.f32 %v556, %v561
      %v563 = vmax.f32 %v557, %v502
      %v564 = vsel %vm524, %v503, -inf
      %v565 = vmax.f32 %v559, %v564
      %v566 = vmax.f32 %v560, %v504
      %v567 = vsel %vm524, %v505, -inf
      %v568 = vmax.f32 %v562, %v567
      %v569 = vmax.f32 %v563, %v506
      %v570 = vsel %vm524, %v507, -inf
      %v571 = vmax.f32 %v565, %v570
      %v572 = vmax.f32 %v566, %v508
      %v573 = vsel %vm524, %v509, -inf
      %v574 = vmax.f32 %v568, %v573
      %v575 = vmax.f32 %v569, %v510
      %v576 = vsel %vm524, %v511, -inf
      %v577 = vmax.f32 %v571, %v576
      %v578 = vmax.f32 %v572, %v512
      %v579 = vsel %vm524, %v513, -inf
      %v580 = vmax.f32 %v574, %v579
      %v581 = vmax.f32 %v575, %v514
      %v582 = vsel %vm524, %v515, -inf
      %v583 = vmax.f32 %v577, %v582
      %v584 = vmax.f32 %v578, %v516
      %v585 = vsel %vm524, %v517, -inf
      %v586 = vmax.f32 %v580, %v585
      %v587 = vmax.f32 %v581, %v518
      %v588 = vsel %vm524, %v519, -inf
      %v589 = vmax.f32 %v583, %v588
      %v590 = vmax.f32 %v584, %v520
      %v591 = vsel %vm524, %v521, -inf
      %v592 = vmax.f32 %v586, %v591
      %vm593 = vcmask 1043456
      %v594 = vsel %vm593, %v522, -inf
      %v595 = vmax.f32 %v587, %v594
      %vm596 = vcmask 551936
      %v597 = vsel %vm596, %v523, -inf
      %v598 = vmax.f32 %v589, %v597
      %v599 = vmax.f32 %v595, %v598
      %v600 = vmax.f32 %v590, %v592
      %v601 = vmax.f32 %v599, %v600
      %602 = vmax.xlane.f32.xlu0 %v601
      %v603 = vpop.xlane.xlu0 %602
      %v604 = vrot.slane %v603, 4
      %v605 = vmax.f32 %v603, %v604
      %v606 = vrot.slane %v605, 2
      %v607 = vmax.f32 %v605, %v606
      %v608 = vrot.slane %v607, 1
      %v609 = vmax.f32 %v607, %v608
      %s610 = vtos %v609
      %s611 = smax.f32 %s610, 1e-12
      %v612 = vstv %s611
      %v613 = vrcp.pop %v612
      %v614 = vmul.f32 %v612, %v613
      %v615 = vsub.f32 1.0, %v614
      %v616 = vmul.f32 %v613, %v615
      %v617 = vadd.f32 %v613, %v616
      %vm618 = vweird.f32 %v612
      %vm619 = vweird.f32 %v613
      %vm620 = vmor %vm618, %vm619
      %v621 = vsel %vm620, %v613, %v617
      %v622 = vand.u32 2147483647, %v612
      %vm623 = vcmp.eq.f32.partialorder %v622, 8.507059e+37
      %v624 = vand.u32 %v612, 2147483648
      %v625 = vor.u32 1.1754944e-38, %v624
      %v626 = vsel %vm623, %v625, %v621
      %s627 = vtos %v626
      %v628 = vmul.f32 %v189, %v189
      %v629 = vmul.f32 %v190, %v190
      %v630 = vmul.f32 %v191, %v191
      %v631 = vmul.f32 %v192, %v192
      %v632 = vmul.f32 %v193, %v193
      %v633 = vmul.f32 %v194, %v194
      %v634 = vmul.f32 %v195, %v195
      %v635 = vmul.f32 %v196, %v196
      %v636 = vmul.f32 %v197, %v197
      %v637 = vmul.f32 %v198, %v198
      %v638 = vmul.f32 %v199, %v199
      %v639 = vmul.f32 %v200, %v200
      %v640 = vmul.f32 %v201, %v201
      %v641 = vmul.f32 %v202, %v202
      %v642 = vmul.f32 %v203, %v203
      %v643 = vmul.f32 %v204, %v204
      %v644 = vmul.f32 %v205, %v205
      %v645 = vmul.f32 %v206, %v206
      %v646 = vmul.f32 %v207, %v207
      %v647 = vmul.f32 %v208, %v208
      %v648 = vmul.f32 %v209, %v209
      %v649 = vmul.f32 %v210, %v210
      %v650 = vmul.f32 %v211, %v211
      %v651 = vmul.f32 %v212, %v212
      %v652 = vmul.f32 %v213, %v213
      %vm653 = vcmask 64512
      %v654 = vsel %vm653, %v628, 0.0
      %655 = vadd.xlane.f32.xlu0 %v654
      %v656 = vpop.xlane.xlu0 %655
      %v657 = vsel %vm653, %v629, 0.0
      %658 = vadd.xlane.f32.xlu0 %v657
      %v659 = vpop.xlane.xlu0 %658
      %v660 = vsel %vm653, %v630, 0.0
      %661 = vadd.xlane.f32.xlu0 %v660
      %v662 = vpop.xlane.xlu0 %661
      %v663 = vsel %vm653, %v631, 0.0
      %664 = vadd.xlane.f32.xlu0 %v663
      %v665 = vpop.xlane.xlu0 %664
      %v666 = vsel %vm653, %v632, 0.0
      %667 = vadd.xlane.f32.xlu0 %v666
      %v668 = vpop.xlane.xlu0 %667
      %v669 = vsel %vm653, %v633, 0.0
      %670 = vadd.xlane.f32.xlu0 %v669
      %v671 = vpop.xlane.xlu0 %670
      %v672 = vsel %vm653, %v634, 0.0
      %673 = vadd.xlane.f32.xlu0 %v672
      %v674 = vpop.xlane.xlu0 %673
      %v675 = vsel %vm653, %v635, 0.0
      %676 = vadd.xlane.f32.xlu0 %v675
      %v677 = vpop.xlane.xlu0 %676
      %v678 = vsel %vm653, %v636, 0.0
      %679 = vadd.xlane.f32.xlu0 %v678
      %v680 = vpop.xlane.xlu0 %679
      %v681 = vsel %vm653, %v637, 0.0
      %682 = vadd.xlane.f32.xlu0 %v681
      %v683 = vpop.xlane.xlu0 %682
      %v684 = vsel %vm653, %v638, 0.0
      %685 = vadd.xlane.f32.xlu0 %v684
      %v686 = vpop.xlane.xlu0 %685
      %v687 = vsel %vm653, %v639, 0.0
      %688 = vadd.xlane.f32.xlu0 %v687
      %v689 = vpop.xlane.xlu0 %688
      %v690 = vsel %vm653, %v640, 0.0
      %691 = vadd.xlane.f32.xlu0 %v690
      %v692 = vpop.xlane.xlu0 %691
      %v693 = vsel %vm653, %v641, 0.0
      %694 = vadd.xlane.f32.xlu0 %v693
      %v695 = vpop.xlane.xlu0 %694
      %v696 = vsel %vm653, %v642, 0.0
      %697 = vadd.xlane.f32.xlu0 %v696
      %v698 = vpop.xlane.xlu0 %697
      %v699 = vsel %vm653, %v643, 0.0
      %700 = vadd.xlane.f32.xlu0 %v699
      %v701 = vpop.xlane.xlu0 %700
      %v702 = vsel %vm653, %v644, 0.0
      %703 = vadd.xlane.f32.xlu0 %v702
      %v704 = vpop.xlane.xlu0 %703
      %v705 = vsel %vm653, %v645, 0.0
      %706 = vadd.xlane.f32.xlu0 %v705
      %v707 = vpop.xlane.xlu0 %706
      %v708 = vsel %vm653, %v646, 0.0
      %709 = vadd.xlane.f32.xlu0 %v708
      %v710 = vpop.xlane.xlu0 %709
      %v711 = vsel %vm653, %v647, 0.0
      %712 = vadd.xlane.f32.xlu0 %v711
      %v713 = vpop.xlane.xlu0 %712
      %v714 = vsel %vm653, %v648, 0.0
      %715 = vadd.xlane.f32.xlu0 %v714
      %v716 = vpop.xlane.xlu0 %715
      %v717 = vsel %vm653, %v649, 0.0
      %718 = vadd.xlane.f32.xlu0 %v717
      %v719 = vpop.xlane.xlu0 %718
      %v720 = vsel %vm653, %v650, 0.0
      %721 = vadd.xlane.f32.xlu0 %v720
      %v722 = vpop.xlane.xlu0 %721
      %v723 = vsel %vm653, %v651, 0.0
      %724 = vadd.xlane.f32.xlu0 %v723
      %v725 = vpop.xlane.xlu0 %724
      %vm726 = vcmask 60416
      %v727 = vsel %vm726, %v652, 0.0
      %728 = vadd.xlane.f32.xlu0 %v727
      %v729 = vpop.xlane.xlu0 %728
      %v730 = vmul.f32 %v656, -0.5
      %v731 = vmul.f32 %v659, -0.5
      %v732 = vmul.f32 %v662, -0.5
      %v733 = vmul.f32 %v665, -0.5
      %v734 = vmul.f32 %v668, -0.5
      %v735 = vmul.f32 %v671, -0.5
      %v736 = vmul.f32 %v674, -0.5
      %v737 = vmul.f32 %v677, -0.5
      %v738 = vmul.f32 %v680, -0.5
      %v739 = vmul.f32 %v683, -0.5
      %v740 = vmul.f32 %v686, -0.5
      %v741 = vmul.f32 %v689, -0.5
      %v742 = vmul.f32 %v692, -0.5
      %v743 = vmul.f32 %v695, -0.5
      %v744 = vmul.f32 %v698, -0.5
      %v745 = vmul.f32 %v701, -0.5
      %v746 = vmul.f32 %v704, -0.5
      %v747 = vmul.f32 %v707, -0.5
      %v748 = vmul.f32 %v710, -0.5
      %v749 = vmul.f32 %v713, -0.5
      %v750 = vmul.f32 %v716, -0.5
      %v751 = vmul.f32 %v719, -0.5
      %v752 = vmul.f32 %v722, -0.5
      %v753 = vmul.f32 %v725, -0.5
      %v754 = vmul.f32 %v729, -0.5
      %v756 = vsel %vm653, -0.5, 0
      %v759 = vsel %vm653, %v628, 0
      %v762 = vsel %vm653, %v629, 0
      %v765 = vsel %vm653, %v630, 0
      %v768 = vsel %vm653, %v631, 0
      %v771 = vsel %vm653, %v632, 0
      %v774 = vsel %vm653, %v633, 0
      %v777 = vsel %vm653, %v634, 0
      %v780 = vsel %vm653, %v635, 0
      %v783 = vsel %vm653, %v636, 0
      %v786 = vsel %vm653, %v637, 0
      %v789 = vsel %vm653, %v638, 0
      %v792 = vsel %vm653, %v639, 0
      %v795 = vsel %vm653, %v640, 0
      %v798 = vsel %vm653, %v641, 0
      %v801 = vsel %vm653, %v642, 0
      %v804 = vsel %vm653, %v643, 0
      %v807 = vsel %vm653, %v644, 0
      %v810 = vsel %vm653, %v645, 0
      %v813 = vsel %vm653, %v646, 0
      %v816 = vsel %vm653, %v647, 0
      %v819 = vsel %vm653, %v648, 0
      %v822 = vsel %vm653, %v649, 0
      %v825 = vsel %vm653, %v650, 0
      %v828 = vsel %vm653, %v651, 0
      %v831 = vsel %vm653, %v652, 0
      %833 = vmatpush.xpose.msra.mxu0 %v804
      %834 = vmatpush.xpose.msra.mxu0 %v801
      %835 = vmatpush.xpose.msra.mxu0 %v798
      %836 = vmatpush.xpose.msra.mxu0 %v795
      %837 = vmatpush.xpose.msra.mxu0 %v792
      %838 = vmatpush.xpose.msra.mxu0 %v789
      %839 = vmatpush.xpose.msra.mxu0 %v786
      %840 = vmatpush.xpose.msra.mxu0 %v783
      %841 = vmatpush.xpose.msra.mxu0 %v780
      %842 = vmatpush.xpose.msra.mxu0 %v777
      %843 = vmatpush.xpose.msra.mxu0 %v774
      %844 = vmatpush.xpose.msra.mxu0 %v771
      %845 = vmatpush.xpose.msra.mxu0 %v768
      %846 = vmatpush.xpose.msra.mxu0 %v765
      %847 = vmatpush.xpose.msra.mxu0 %v762
      %848 = vmatpush.xpose.msra.mxu0 %v759
      %849 = vmatmul.f32.gmra.mxu0 %v756
      %v850 = vpop.f32.mrf.mxu0
      %v851 = vadd.f32 0.0, %v850
      %852 = vdwg.mxu0
      %853 = vmatpush.xpose.msra.mxu0 0.0
      %854 = vmatpush.xpose.msra.mxu0 0.0
      %855 = vmatpush.xpose.msra.mxu0 0.0
      %856 = vmatpush.xpose.msra.mxu0 0.0
      %857 = vmatpush.xpose.msra.mxu0 0.0
      %858 = vmatpush.xpose.msra.mxu0 0.0
      %859 = vmatpush.xpose.msra.mxu0 0.0
      %860 = vmatpush.xpose.msra.mxu0 %v831
      %861 = vmatpush.xpose.msra.mxu0 %v828
      %862 = vmatpush.xpose.msra.mxu0 %v825
      %863 = vmatpush.xpose.msra.mxu0 %v822
      %864 = vmatpush.xpose.msra.mxu0 %v819
      %865 = vmatpush.xpose.msra.mxu0 %v816
      %866 = vmatpush.xpose.msra.mxu0 %v813
      %867 = vmatpush.xpose.msra.mxu0 %v810
      %868 = vmatpush.xpose.msra.mxu0 %v807
      %869 = vmatmul.f32.gmra.mxu0 %v756
      %v870 = vpop.f32.mrf.mxu0
      %v871 = vadd.f32 0.0, %v870
      %872 = vdwg.mxu0
      %v874 = vsel %vm653, %v189, 0
      %v877 = vsel %vm653, %v190, 0
      %v880 = vsel %vm653, %v191, 0
      %v883 = vsel %vm653, %v192, 0
      %v886 = vsel %vm653, %v193, 0
      %v889 = vsel %vm653, %v194, 0
      %v892 = vsel %vm653, %v195, 0
      %v895 = vsel %vm653, %v196, 0
      %v898 = vsel %vm653, %v197, 0
      %v901 = vsel %vm653, %v198, 0
      %v904 = vsel %vm653, %v199, 0
      %v907 = vsel %vm653, %v200, 0
      %v910 = vsel %vm653, %v201, 0
      %v913 = vsel %vm653, %v202, 0
      %v916 = vsel %vm653, %v203, 0
      %v919 = vsel %vm653, %v204, 0
      %v922 = vsel %vm653, %v205, 0
      %v925 = vsel %vm653, %v206, 0
      %v928 = vsel %vm653, %v207, 0
      %v931 = vsel %vm653, %v208, 0
      %v934 = vsel %vm653, %v209, 0
      %v937 = vsel %vm653, %v210, 0
      %v940 = vsel %vm653, %v211, 0
      %v943 = vsel %vm653, %v212, 0
      %v946 = vsel %vm653, %v213, 0
      %948 = vmatpush.xpose.msra.mxu0 %v919
      %949 = vmatpush.xpose.msra.mxu0 %v916
      %950 = vmatpush.xpose.msra.mxu0 %v913
      %951 = vmatpush.xpose.msra.mxu0 %v910
      %952 = vmatpush.xpose.msra.mxu0 %v907
      %953 = vmatpush.xpose.msra.mxu0 %v904
      %954 = vmatpush.xpose.msra.mxu0 %v901
      %955 = vmatpush.xpose.msra.mxu0 %v898
      %956 = vmatpush.xpose.msra.mxu0 %v895
      %957 = vmatpush.xpose.msra.mxu0 %v892
      %958 = vmatpush.xpose.msra.mxu0 %v889
      %959 = vmatpush.xpose.msra.mxu0 %v886
      %960 = vmatpush.xpose.msra.mxu0 %v883
      %961 = vmatpush.xpose.msra.mxu0 %v880
      %962 = vmatpush.xpose.msra.mxu0 %v877
      %963 = vmatpush.xpose.msra.mxu0 %v874
      %964 = vmatmul.f32.gmra.mxu0 %v874
      %v965 = vpop.f32.mrf.mxu0
      %v966 = vadd.f32 %v730, %v965
      %967 = vmatmul.f32.gmra.mxu0 %v877
      %v968 = vpop.f32.mrf.mxu0
      %v969 = vadd.f32 %v731, %v968
      %970 = vmatmul.f32.gmra.mxu0 %v880
      %v971 = vpop.f32.mrf.mxu0
      %v972 = vadd.f32 %v732, %v971
      %973 = vmatmul.f32.gmra.mxu0 %v883
      %v974 = vpop.f32.mrf.mxu0
      %v975 = vadd.f32 %v733, %v974
      %976 = vmatmul.f32.gmra.mxu0 %v886
      %v977 = vpop.f32.mrf.mxu0
      %v978 = vadd.f32 %v734, %v977
      %979 = vmatmul.f32.gmra.mxu0 %v889
      %v980 = vpop.f32.mrf.mxu0
      %v981 = vadd.f32 %v735, %v980
      %982 = vmatmul.f32.gmra.mxu0 %v892
      %v983 = vpop.f32.mrf.mxu0
      %v984 = vadd.f32 %v736, %v983
      %985 = vmatmul.f32.gmra.mxu0 %v895
      %v986 = vpop.f32.mrf.mxu0
      %v987 = vadd.f32 %v737, %v986
      %988 = vmatmul.f32.gmra.mxu0 %v898
      %v989 = vpop.f32.mrf.mxu0
      %v990 = vadd.f32 %v738, %v989
      %991 = vmatmul.f32.gmra.mxu0 %v901
      %v992 = vpop.f32.mrf.mxu0
      %v993 = vadd.f32 %v739, %v992
      %994 = vmatmul.f32.gmra.mxu0 %v904
      %v995 = vpop.f32.mrf.mxu0
      %v996 = vadd.f32 %v740, %v995
      %997 = vmatmul.f32.gmra.mxu0 %v907
      %v998 = vpop.f32.mrf.mxu0
      %v999 = vadd.f32 %v741, %v998
      %1000 = vmatmul.f32.gmra.mxu0 %v910
      %v1001 = vpop.f32.mrf.mxu0
      %v1002 = vadd.f32 %v742, %v1001
      %1003 = vmatmul.f32.gmra.mxu0 %v913
      %v1004 = vpop.f32.mrf.mxu0
      %v1005 = vadd.f32 %v743, %v1004
      %1006 = vmatmul.f32.gmra.mxu0 %v916
      %v1007 = vpop.f32.mrf.mxu0
      %v1008 = vadd.f32 %v744, %v1007
      %1009 = vmatmul.f32.gmra.mxu0 %v919
      %v1010 = vpop.f32.mrf.mxu0
      %v1011 = vadd.f32 %v745, %v1010
      %1012 = vmatmul.f32.gmra.mxu0 %v922
      %v1013 = vpop.f32.mrf.mxu0
      %v1014 = vadd.f32 %v746, %v1013
      %1015 = vmatmul.f32.gmra.mxu0 %v925
      %v1016 = vpop.f32.mrf.mxu0
      %v1017 = vadd.f32 %v747, %v1016
      %1018 = vmatmul.f32.gmra.mxu0 %v928
      %v1019 = vpop.f32.mrf.mxu0
      %v1020 = vadd.f32 %v748, %v1019
      %1021 = vmatmul.f32.gmra.mxu0 %v931
      %v1022 = vpop.f32.mrf.mxu0
      %v1023 = vadd.f32 %v749, %v1022
      %1024 = vmatmul.f32.gmra.mxu0 %v934
      %v1025 = vpop.f32.mrf.mxu0
      %v1026 = vadd.f32 %v750, %v1025
      %1027 = vmatmul.f32.gmra.mxu0 %v937
      %v1028 = vpop.f32.mrf.mxu0
      %v1029 = vadd.f32 %v751, %v1028
      %1030 = vmatmul.f32.gmra.mxu0 %v940
      %v1031 = vpop.f32.mrf.mxu0
      %v1032 = vadd.f32 %v752, %v1031
      %1033 = vmatmul.f32.gmra.mxu0 %v943
      %v1034 = vpop.f32.mrf.mxu0
      %v1035 = vadd.f32 %v753, %v1034
      %1036 = vmatmul.f32.gmra.mxu0 %v946
      %v1037 = vpop.f32.mrf.mxu0
      %v1038 = vadd.f32 %v754, %v1037
      %1039 = vdwg.mxu0
      %1040 = vmatpush.xpose.msra.mxu0 0.0
      %1041 = vmatpush.xpose.msra.mxu0 0.0
      %1042 = vmatpush.xpose.msra.mxu0 0.0
      %1043 = vmatpush.xpose.msra.mxu0 0.0
      %1044 = vmatpush.xpose.msra.mxu0 0.0
      %1045 = vmatpush.xpose.msra.mxu0 0.0
      %1046 = vmatpush.xpose.msra.mxu0 0.0
      %1047 = vmatpush.xpose.msra.mxu0 %v946
      %1048 = vmatpush.xpose.msra.mxu0 %v943
      %1049 = vmatpush.xpose.msra.mxu0 %v940
      %1050 = vmatpush.xpose.msra.mxu0 %v937
      %1051 = vmatpush.xpose.msra.mxu0 %v934
      %1052 = vmatpush.xpose.msra.mxu0 %v931
      %1053 = vmatpush.xpose.msra.mxu0 %v928
      %1054 = vmatpush.xpose.msra.mxu0 %v925
      %1055 = vmatpush.xpose.msra.mxu0 %v922
      %1056 = vmatmul.f32.gmra.mxu0 %v874
      %v1057 = vpop.f32.mrf.mxu0
      %v1058 = vadd.f32 %v730, %v1057
      %1059 = vmatmul.f32.gmra.mxu0 %v877
      %v1060 = vpop.f32.mrf.mxu0
      %v1061 = vadd.f32 %v731, %v1060
      %1062 = vmatmul.f32.gmra.mxu0 %v880
      %v1063 = vpop.f32.mrf.mxu0
      %v1064 = vadd.f32 %v732, %v1063
      %1065 = vmatmul.f32.gmra.mxu0 %v883
      %v1066 = vpop.f32.mrf.mxu0
      %v1067 = vadd.f32 %v733, %v1066
      %1068 = vmatmul.f32.gmra.mxu0 %v886
      %v1069 = vpop.f32.mrf.mxu0
      %v1070 = vadd.f32 %v734, %v1069
      %1071 = vmatmul.f32.gmra.mxu0 %v889
      %v1072 = vpop.f32.mrf.mxu0
      %v1073 = vadd.f32 %v735, %v1072
      %1074 = vmatmul.f32.gmra.mxu0 %v892
      %v1075 = vpop.f32.mrf.mxu0
      %v1076 = vadd.f32 %v736, %v1075
      %1077 = vmatmul.f32.gmra.mxu0 %v895
      %v1078 = vpop.f32.mrf.mxu0
      %v1079 = vadd.f32 %v737, %v1078
      %1080 = vmatmul.f32.gmra.mxu0 %v898
      %v1081 = vpop.f32.mrf.mxu0
      %v1082 = vadd.f32 %v738, %v1081
      %1083 = vmatmul.f32.gmra.mxu0 %v901
      %v1084 = vpop.f32.mrf.mxu0
      %v1085 = vadd.f32 %v739, %v1084
      %1086 = vmatmul.f32.gmra.mxu0 %v904
      %v1087 = vpop.f32.mrf.mxu0
      %v1088 = vadd.f32 %v740, %v1087
      %1089 = vmatmul.f32.gmra.mxu0 %v907
      %v1090 = vpop.f32.mrf.mxu0
      %v1091 = vadd.f32 %v741, %v1090
      %1092 = vmatmul.f32.gmra.mxu0 %v910
      %v1093 = vpop.f32.mrf.mxu0
      %v1094 = vadd.f32 %v742, %v1093
      %1095 = vmatmul.f32.gmra.mxu0 %v913
      %v1096 = vpop.f32.mrf.mxu0
      %v1097 = vadd.f32 %v743, %v1096
      %1098 = vmatmul.f32.gmra.mxu0 %v916
      %v1099 = vpop.f32.mrf.mxu0
      %v1100 = vadd.f32 %v744, %v1099
      %1101 = vmatmul.f32.gmra.mxu0 %v919
      %v1102 = vpop.f32.mrf.mxu0
      %v1103 = vadd.f32 %v745, %v1102
      %1104 = vmatmul.f32.gmra.mxu0 %v922
      %v1105 = vpop.f32.mrf.mxu0
      %v1106 = vadd.f32 %v746, %v1105
      %1107 = vmatmul.f32.gmra.mxu0 %v925
      %v1108 = vpop.f32.mrf.mxu0
      %v1109 = vadd.f32 %v747, %v1108
      %1110 = vmatmul.f32.gmra.mxu0 %v928
      %v1111 = vpop.f32.mrf.mxu0
      %v1112 = vadd.f32 %v748, %v1111
      %1113 = vmatmul.f32.gmra.mxu0 %v931
      %v1114 = vpop.f32.mrf.mxu0
      %v1115 = vadd.f32 %v749, %v1114
      %1116 = vmatmul.f32.gmra.mxu0 %v934
      %v1117 = vpop.f32.mrf.mxu0
      %v1118 = vadd.f32 %v750, %v1117
      %1119 = vmatmul.f32.gmra.mxu0 %v937
      %v1120 = vpop.f32.mrf.mxu0
      %v1121 = vadd.f32 %v751, %v1120
      %1122 = vmatmul.f32.gmra.mxu0 %v940
      %v1123 = vpop.f32.mrf.mxu0
      %v1124 = vadd.f32 %v752, %v1123
      %1125 = vmatmul.f32.gmra.mxu0 %v943
      %v1126 = vpop.f32.mrf.mxu0
      %v1127 = vadd.f32 %v753, %v1126
      %1128 = vmatmul.f32.gmra.mxu0 %v946
      %v1129 = vpop.f32.mrf.mxu0
      %v1130 = vadd.f32 %v754, %v1129
      %1131 = vdwg.mxu0
      %v1132 = vperm.slane %v851, 0
      %v1133 = vperm.slane %v871, 0
      %v1134 = vadd.f32 %v966, %v1132
      %v1135 = vadd.f32 %v1058, %v1133
      %v1136 = vadd.f32 %v969, %v1132
      %v1137 = vadd.f32 %v1061, %v1133
      %v1138 = vadd.f32 %v972, %v1132
      %v1139 = vadd.f32 %v1064, %v1133
      %v1140 = vadd.f32 %v975, %v1132
      %v1141 = vadd.f32 %v1067, %v1133
      %v1142 = vadd.f32 %v978, %v1132
      %v1143 = vadd.f32 %v1070, %v1133
      %v1144 = vadd.f32 %v981, %v1132
      %v1145 = vadd.f32 %v1073, %v1133
      %v1146 = vadd.f32 %v984, %v1132
      %v1147 = vadd.f32 %v1076, %v1133
      %v1148 = vadd.f32 %v987, %v1132
      %v1149 = vadd.f32 %v1079, %v1133
      %v1150 = vadd.f32 %v990, %v1132
      %v1151 = vadd.f32 %v1082, %v1133
      %v1152 = vadd.f32 %v993, %v1132
      %v1153 = vadd.f32 %v1085, %v1133
      %v1154 = vadd.f32 %v996, %v1132
      %v1155 = vadd.f32 %v1088, %v1133
      %v1156 = vadd.f32 %v999, %v1132
      %v1157 = vadd.f32 %v1091, %v1133
      %v1158 = vadd.f32 %v1002, %v1132
      %v1159 = vadd.f32 %v1094, %v1133
      %v1160 = vadd.f32 %v1005, %v1132
      %v1161 = vadd.f32 %v1097, %v1133
      %v1162 = vadd.f32 %v1008, %v1132
      %v1163 = vadd.f32 %v1100, %v1133
      %v1164 = vadd.f32 %v1011, %v1132
      %v1165 = vadd.f32 %v1103, %v1133
      %v1166 = vadd.f32 %v1014, %v1132
      %v1167 = vadd.f32 %v1106, %v1133
      %v1168 = vadd.f32 %v1017, %v1132
      %v1169 = vadd.f32 %v1109, %v1133
      %v1170 = vadd.f32 %v1020, %v1132
      %v1171 = vadd.f32 %v1112, %v1133
      %v1172 = vadd.f32 %v1023, %v1132
      %v1173 = vadd.f32 %v1115, %v1133
      %v1174 = vadd.f32 %v1026, %v1132
      %v1175 = vadd.f32 %v1118, %v1133
      %v1176 = vadd.f32 %v1029, %v1132
      %v1177 = vadd.f32 %v1121, %v1133
      %v1178 = vadd.f32 %v1032, %v1132
      %v1179 = vadd.f32 %v1124, %v1133
      %v1180 = vadd.f32 %v1035, %v1132
      %v1181 = vadd.f32 %v1127, %v1133
      %v1182 = vadd.f32 %v1038, %v1132
      %v1183 = vadd.f32 %v1130, %v1133
      %v1184 = vmin.f32 %v1134, 0.0
      %v1185 = vmin.f32 %v1135, 0.0
      %v1186 = vmin.f32 %v1136, 0.0
      %v1187 = vmin.f32 %v1137, 0.0
      %v1188 = vmin.f32 %v1138, 0.0
      %v1189 = vmin.f32 %v1139, 0.0
      %v1190 = vmin.f32 %v1140, 0.0
      %v1191 = vmin.f32 %v1141, 0.0
      %v1192 = vmin.f32 %v1142, 0.0
      %v1193 = vmin.f32 %v1143, 0.0
      %v1194 = vmin.f32 %v1144, 0.0
      %v1195 = vmin.f32 %v1145, 0.0
      %v1196 = vmin.f32 %v1146, 0.0
      %v1197 = vmin.f32 %v1147, 0.0
      %v1198 = vmin.f32 %v1148, 0.0
      %v1199 = vmin.f32 %v1149, 0.0
      %v1200 = vmin.f32 %v1150, 0.0
      %v1201 = vmin.f32 %v1151, 0.0
      %v1202 = vmin.f32 %v1152, 0.0
      %v1203 = vmin.f32 %v1153, 0.0
      %v1204 = vmin.f32 %v1154, 0.0
      %v1205 = vmin.f32 %v1155, 0.0
      %v1206 = vmin.f32 %v1156, 0.0
      %v1207 = vmin.f32 %v1157, 0.0
      %v1208 = vmin.f32 %v1158, 0.0
      %v1209 = vmin.f32 %v1159, 0.0
      %v1210 = vmin.f32 %v1160, 0.0
      %v1211 = vmin.f32 %v1161, 0.0
      %v1212 = vmin.f32 %v1162, 0.0
      %v1213 = vmin.f32 %v1163, 0.0
      %v1214 = vmin.f32 %v1164, 0.0
      %v1215 = vmin.f32 %v1165, 0.0
      %v1216 = vmin.f32 %v1166, 0.0
      %v1217 = vmin.f32 %v1167, 0.0
      %v1218 = vmin.f32 %v1168, 0.0
      %v1219 = vmin.f32 %v1169, 0.0
      %v1220 = vmin.f32 %v1170, 0.0
      %v1221 = vmin.f32 %v1171, 0.0
      %v1222 = vmin.f32 %v1172, 0.0
      %v1223 = vmin.f32 %v1173, 0.0
      %v1224 = vmin.f32 %v1174, 0.0
      %v1225 = vmin.f32 %v1175, 0.0
      %v1226 = vmin.f32 %v1176, 0.0
      %v1227 = vmin.f32 %v1177, 0.0
      %v1228 = vmin.f32 %v1178, 0.0
      %v1229 = vmin.f32 %v1179, 0.0
      %v1230 = vmin.f32 %v1180, 0.0
      %v1231 = vmin.f32 %v1181, 0.0
      %v1232 = vmin.f32 %v1182, 0.0
      %v1233 = vmin.f32 %v1183, 0.0
      %v1234 = vmul.f32 %v1184, 1.442695
      %v1235 = vpow.pop %v1234
      %v1236 = vmul.f32 %v1185, 1.442695
      %v1237 = vpow.pop %v1236
      %v1238 = vmul.f32 %v1186, 1.442695
      %v1239 = vpow.pop %v1238
      %v1240 = vmul.f32 %v1187, 1.442695
      %v1241 = vpow.pop %v1240
      %v1242 = vmul.f32 %v1188, 1.442695
      %v1243 = vpow.pop %v1242
      %v1244 = vmul.f32 %v1189, 1.442695
      %v1245 = vpow.pop %v1244
      %v1246 = vmul.f32 %v1190, 1.442695
      %v1247 = vpow.pop %v1246
      %v1248 = vmul.f32 %v1191, 1.442695
      %v1249 = vpow.pop %v1248
      %v1250 = vmul.f32 %v1192, 1.442695
      %v1251 = vpow.pop %v1250
      %v1252 = vmul.f32 %v1193, 1.442695
      %v1253 = vpow.pop %v1252
      %v1254 = vmul.f32 %v1194, 1.442695
      %v1255 = vpow.pop %v1254
      %v1256 = vmul.f32 %v1195, 1.442695
      %v1257 = vpow.pop %v1256
      %v1258 = vmul.f32 %v1196, 1.442695
      %v1259 = vpow.pop %v1258
      %v1260 = vmul.f32 %v1197, 1.442695
      %v1261 = vpow.pop %v1260
      %v1262 = vmul.f32 %v1198, 1.442695
      %v1263 = vpow.pop %v1262
      %v1264 = vmul.f32 %v1199, 1.442695
      %v1265 = vpow.pop %v1264
      %v1266 = vmul.f32 %v1200, 1.442695
      %v1267 = vpow.pop %v1266
      %v1268 = vmul.f32 %v1201, 1.442695
      %v1269 = vpow.pop %v1268
      %v1270 = vmul.f32 %v1202, 1.442695
      %v1271 = vpow.pop %v1270
      %v1272 = vmul.f32 %v1203, 1.442695
      %v1273 = vpow.pop %v1272
      %v1274 = vmul.f32 %v1204, 1.442695
      %v1275 = vpow.pop %v1274
      %v1276 = vmul.f32 %v1205, 1.442695
      %v1277 = vpow.pop %v1276
      %v1278 = vmul.f32 %v1206, 1.442695
      %v1279 = vpow.pop %v1278
      %v1280 = vmul.f32 %v1207, 1.442695
      %v1281 = vpow.pop %v1280
      %v1282 = vmul.f32 %v1208, 1.442695
      %v1283 = vpow.pop %v1282
      %v1284 = vmul.f32 %v1209, 1.442695
      %v1285 = vpow.pop %v1284
      %v1286 = vmul.f32 %v1210, 1.442695
      %v1287 = vpow.pop %v1286
      %v1288 = vmul.f32 %v1211, 1.442695
      %v1289 = vpow.pop %v1288
      %v1290 = vmul.f32 %v1212, 1.442695
      %v1291 = vpow.pop %v1290
      %v1292 = vmul.f32 %v1213, 1.442695
      %v1293 = vpow.pop %v1292
      %v1294 = vmul.f32 %v1214, 1.442695
      %v1295 = vpow.pop %v1294
      %v1296 = vmul.f32 %v1215, 1.442695
      %v1297 = vpow.pop %v1296
      %v1298 = vmul.f32 %v1216, 1.442695
      %v1299 = vpow.pop %v1298
      %v1300 = vmul.f32 %v1217, 1.442695
      %v1301 = vpow.pop %v1300
      %v1302 = vmul.f32 %v1218, 1.442695
      %v1303 = vpow.pop %v1302
      %v1304 = vmul.f32 %v1219, 1.442695
      %v1305 = vpow.pop %v1304
      %v1306 = vmul.f32 %v1220, 1.442695
      %v1307 = vpow.pop %v1306
      %v1308 = vmul.f32 %v1221, 1.442695
      %v1309 = vpow.pop %v1308
      %v1310 = vmul.f32 %v1222, 1.442695
      %v1311 = vpow.pop %v1310
      %v1312 = vmul.f32 %v1223, 1.442695
      %v1313 = vpow.pop %v1312
      %v1314 = vmul.f32 %v1224, 1.442695
      %v1315 = vpow.pop %v1314
      %v1316 = vmul.f32 %v1225, 1.442695
      %v1317 = vpow.pop %v1316
      %v1318 = vmul.f32 %v1226, 1.442695
      %v1319 = vpow.pop %v1318
      %v1320 = vmul.f32 %v1227, 1.442695
      %v1321 = vpow.pop %v1320
      %v1322 = vmul.f32 %v1228, 1.442695
      %v1323 = vpow.pop %v1322
      %v1324 = vmul.f32 %v1229, 1.442695
      %v1325 = vpow.pop %v1324
      %v1326 = vmul.f32 %v1230, 1.442695
      %v1327 = vpow.pop %v1326
      %v1328 = vmul.f32 %v1231, 1.442695
      %v1329 = vpow.pop %v1328
      %v1330 = vmul.f32 %v1232, 1.442695
      %v1331 = vpow.pop %v1330
      %v1332 = vmul.f32 %v1233, 1.442695
      %v1333 = vpow.pop %v1332
      %v1334 = vstv %s627
      %v1335 = vmul.f32 %v474, %v1334
      %v1336 = vmul.f32 %v475, %v1334
      %v1337 = vmul.f32 %v476, %v1334
      %v1338 = vmul.f32 %v477, %v1334
      %v1339 = vmul.f32 %v478, %v1334
      %v1340 = vmul.f32 %v479, %v1334
      %v1341 = vmul.f32 %v480, %v1334
      %v1342 = vmul.f32 %v481, %v1334
      %v1343 = vmul.f32 %v482, %v1334
      %v1344 = vmul.f32 %v483, %v1334
      %v1345 = vmul.f32 %v484, %v1334
      %v1346 = vmul.f32 %v485, %v1334
      %v1347 = vmul.f32 %v486, %v1334
      %v1348 = vmul.f32 %v487, %v1334
      %v1349 = vmul.f32 %v488, %v1334
      %v1350 = vmul.f32 %v489, %v1334
      %v1351 = vmul.f32 %v490, %v1334
      %v1352 = vmul.f32 %v491, %v1334
      %v1353 = vmul.f32 %v492, %v1334
      %v1354 = vmul.f32 %v493, %v1334
      %v1355 = vmul.f32 %v494, %v1334
      %v1356 = vmul.f32 %v495, %v1334
      %v1357 = vmul.f32 %v496, %v1334
      %v1358 = vmul.f32 %v497, %v1334
      %v1359 = vmul.f32 %v498, %v1334
      %v1360 = vmul.f32 %v499, %v1334
      %v1361 = vmul.f32 %v500, %v1334
      %v1362 = vmul.f32 %v501, %v1334
      %v1363 = vmul.f32 %v502, %v1334
      %v1364 = vmul.f32 %v503, %v1334
      %v1365 = vmul.f32 %v504, %v1334
      %v1366 = vmul.f32 %v505, %v1334
      %v1367 = vmul.f32 %v506, %v1334
      %v1368 = vmul.f32 %v507, %v1334
      %v1369 = vmul.f32 %v508, %v1334
      %v1370 = vmul.f32 %v509, %v1334
      %v1371 = vmul.f32 %v510, %v1334
      %v1372 = vmul.f32 %v511, %v1334
      %v1373 = vmul.f32 %v512, %v1334
      %v1374 = vmul.f32 %v513, %v1334
      %v1375 = vmul.f32 %v514, %v1334
      %v1376 = vmul.f32 %v515, %v1334
      %v1377 = vmul.f32 %v516, %v1334
      %v1378 = vmul.f32 %v517, %v1334
      %v1379 = vmul.f32 %v518, %v1334
      %v1380 = vmul.f32 %v519, %v1334
      %v1381 = vmul.f32 %v520, %v1334
      %v1382 = vmul.f32 %v521, %v1334
      %v1383 = vmul.f32 %v522, %v1334
      %v1384 = vmul.f32 %v523, %v1334
      %v1385 = vadd.f32 %v1235, %v1335
      %v1386 = vadd.f32 %v1237, %v1336
      %v1387 = vadd.f32 %v1239, %v1337
      %v1388 = vadd.f32 %v1241, %v1338
      %v1389 = vadd.f32 %v1243, %v1339
      %v1390 = vadd.f32 %v1245, %v1340
      %v1391 = vadd.f32 %v1247, %v1341
      %v1392 = vadd.f32 %v1249, %v1342
      %v1393 = vadd.f32 %v1251, %v1343
      %v1394 = vadd.f32 %v1253, %v1344
      %v1395 = vadd.f32 %v1255, %v1345
      %v1396 = vadd.f32 %v1257, %v1346
      %v1397 = vadd.f32 %v1259, %v1347
      %v1398 = vadd.f32 %v1261, %v1348
      %v1399 = vadd.f32 %v1263, %v1349
      %v1400 = vadd.f32 %v1265, %v1350
      %v1401 = vadd.f32 %v1267, %v1351
      %v1402 = vadd.f32 %v1269, %v1352
      %v1403 = vadd.f32 %v1271, %v1353
      %v1404 = vadd.f32 %v1273, %v1354
      %v1405 = vadd.f32 %v1275, %v1355
      %v1406 = vadd.f32 %v1277, %v1356
      %v1407 = vadd.f32 %v1279, %v1357
      %v1408 = vadd.f32 %v1281, %v1358
      %v1409 = vadd.f32 %v1283, %v1359
      %v1410 = vadd.f32 %v1285, %v1360
      %v1411 = vadd.f32 %v1287, %v1361
      %v1412 = vadd.f32 %v1289, %v1362
      %v1413 = vadd.f32 %v1291, %v1363
      %v1414 = vadd.f32 %v1293, %v1364
      %v1415 = vadd.f32 %v1295, %v1365
      %v1416 = vadd.f32 %v1297, %v1366
      %v1417 = vadd.f32 %v1299, %v1367
      %v1418 = vadd.f32 %v1301, %v1368
      %v1419 = vadd.f32 %v1303, %v1369
      %v1420 = vadd.f32 %v1305, %v1370
      %v1421 = vadd.f32 %v1307, %v1371
      %v1422 = vadd.f32 %v1309, %v1372
      %v1423 = vadd.f32 %v1311, %v1373
      %v1424 = vadd.f32 %v1313, %v1374
      %v1425 = vadd.f32 %v1315, %v1375
      %v1426 = vadd.f32 %v1317, %v1376
      %v1427 = vadd.f32 %v1319, %v1377
      %v1428 = vadd.f32 %v1321, %v1378
      %v1429 = vadd.f32 %v1323, %v1379
      %v1430 = vadd.f32 %v1325, %v1380
      %v1431 = vadd.f32 %v1327, %v1381
      %v1432 = vadd.f32 %v1329, %v1382
      %v1433 = vadd.f32 %v1331, %v1383
      %v1434 = vadd.f32 %v1333, %v1384
      %v1435 = vsel %vm524, %v1386, 0.0
      %v1436 = vadd.f32 %v1385, %v1435
      %1437 = vadd.xlane.f32.xlu0 %v1436
      %v1438 = vpop.xlane.xlu0 %1437
      %v1439 = vsel %vm524, %v1388, 0.0
      %v1440 = vadd.f32 %v1387, %v1439
      %1441 = vadd.xlane.f32.xlu0 %v1440
      %v1442 = vpop.xlane.xlu0 %1441
      %v1443 = vsel %vm524, %v1390, 0.0
      %v1444 = vadd.f32 %v1389, %v1443
      %1445 = vadd.xlane.f32.xlu0 %v1444
      %v1446 = vpop.xlane.xlu0 %1445
      %v1447 = vsel %vm524, %v1392, 0.0
      %v1448 = vadd.f32 %v1391, %v1447
      %1449 = vadd.xlane.f32.xlu0 %v1448
      %v1450 = vpop.xlane.xlu0 %1449
      %v1451 = vsel %vm524, %v1394, 0.0
      %v1452 = vadd.f32 %v1393, %v1451
      %1453 = vadd.xlane.f32.xlu0 %v1452
      %v1454 = vpop.xlane.xlu0 %1453
      %v1455 = vsel %vm524, %v1396, 0.0
      %v1456 = vadd.f32 %v1395, %v1455
      %1457 = vadd.xlane.f32.xlu0 %v1456
      %v1458 = vpop.xlane.xlu0 %1457
      %v1459 = vsel %vm524, %v1398, 0.0
      %v1460 = vadd.f32 %v1397, %v1459
      %1461 = vadd.xlane.f32.xlu0 %v1460
      %v1462 = vpop.xlane.xlu0 %1461
      %v1463 = vsel %vm524, %v1400, 0.0
      %v1464 = vadd.f32 %v1399, %v1463
      %1465 = vadd.xlane.f32.xlu0 %v1464
      %v1466 = vpop.xlane.xlu0 %1465
      %v1467 = vsel %vm524, %v1402, 0.0
      %v1468 = vadd.f32 %v1401, %v1467
      %1469 = vadd.xlane.f32.xlu0 %v1468
      %v1470 = vpop.xlane.xlu0 %1469
      %v1471 = vsel %vm524, %v1404, 0.0
      %v1472 = vadd.f32 %v1403, %v1471
      %1473 = vadd.xlane.f32.xlu0 %v1472
      %v1474 = vpop.xlane.xlu0 %1473
      %v1475 = vsel %vm524, %v1406, 0.0
      %v1476 = vadd.f32 %v1405, %v1475
      %1477 = vadd.xlane.f32.xlu0 %v1476
      %v1478 = vpop.xlane.xlu0 %1477
      %v1479 = vsel %vm524, %v1408, 0.0
      %v1480 = vadd.f32 %v1407, %v1479
      %1481 = vadd.xlane.f32.xlu0 %v1480
      %v1482 = vpop.xlane.xlu0 %1481
      %v1483 = vsel %vm524, %v1410, 0.0
      %v1484 = vadd.f32 %v1409, %v1483
      %1485 = vadd.xlane.f32.xlu0 %v1484
      %v1486 = vpop.xlane.xlu0 %1485
      %v1487 = vsel %vm524, %v1412, 0.0
      %v1488 = vadd.f32 %v1411, %v1487
      %1489 = vadd.xlane.f32.xlu0 %v1488
      %v1490 = vpop.xlane.xlu0 %1489
      %v1491 = vsel %vm524, %v1414, 0.0
      %v1492 = vadd.f32 %v1413, %v1491
      %1493 = vadd.xlane.f32.xlu0 %v1492
      %v1494 = vpop.xlane.xlu0 %1493
      %v1495 = vsel %vm524, %v1416, 0.0
      %v1496 = vadd.f32 %v1415, %v1495
      %1497 = vadd.xlane.f32.xlu0 %v1496
      %v1498 = vpop.xlane.xlu0 %1497
      %v1499 = vsel %vm524, %v1418, 0.0
      %v1500 = vadd.f32 %v1417, %v1499
      %1501 = vadd.xlane.f32.xlu0 %v1500
      %v1502 = vpop.xlane.xlu0 %1501
      %v1503 = vsel %vm524, %v1420, 0.0
      %v1504 = vadd.f32 %v1419, %v1503
      %1505 = vadd.xlane.f32.xlu0 %v1504
      %v1506 = vpop.xlane.xlu0 %1505
      %v1507 = vsel %vm524, %v1422, 0.0
      %v1508 = vadd.f32 %v1421, %v1507
      %1509 = vadd.xlane.f32.xlu0 %v1508
      %v1510 = vpop.xlane.xlu0 %1509
      %v1511 = vsel %vm524, %v1424, 0.0
      %v1512 = vadd.f32 %v1423, %v1511
      %1513 = vadd.xlane.f32.xlu0 %v1512
      %v1514 = vpop.xlane.xlu0 %1513
      %v1515 = vsel %vm524, %v1426, 0.0
      %v1516 = vadd.f32 %v1425, %v1515
      %1517 = vadd.xlane.f32.xlu0 %v1516
      %v1518 = vpop.xlane.xlu0 %1517
      %v1519 = vsel %vm524, %v1428, 0.0
      %v1520 = vadd.f32 %v1427, %v1519
      %1521 = vadd.xlane.f32.xlu0 %v1520
      %v1522 = vpop.xlane.xlu0 %1521
      %v1523 = vsel %vm524, %v1430, 0.0
      %v1524 = vadd.f32 %v1429, %v1523
      %1525 = vadd.xlane.f32.xlu0 %v1524
      %v1526 = vpop.xlane.xlu0 %1525
      %v1527 = vsel %vm524, %v1432, 0.0
      %v1528 = vadd.f32 %v1431, %v1527
      %1529 = vadd.xlane.f32.xlu0 %v1528
      %v1530 = vpop.xlane.xlu0 %1529
      %v1531 = vsel %vm593, %v1433, 0.0
      %v1532 = vsel %vm596, %v1434, 0.0
      %v1533 = vadd.f32 %v1531, %v1532
      %1534 = vadd.xlane.f32.xlu0 %v1533
      %v1535 = vpop.xlane.xlu0 %1534
      %v1537 = vsel %vm524, 1.0, 0
      %v1540 = vsel %vm593, %v1433, 0
      %v1543 = vsel %vm593, %v1434, 0
      %1545 = vmatpush.msra.mxu0 %v1415
      %1546 = vmatpush.msra.mxu0 %v1413
      %1547 = vmatpush.msra.mxu0 %v1411
      %1548 = vmatpush.msra.mxu0 %v1409
      %1549 = vmatpush.msra.mxu0 %v1407
      %1550 = vmatpush.msra.mxu0 %v1405
      %1551 = vmatpush.msra.mxu0 %v1403
      %1552 = vmatpush.msra.mxu0 %v1401
      %1553 = vmatpush.msra.mxu0 %v1399
      %1554 = vmatpush.msra.mxu0 %v1397
      %1555 = vmatpush.msra.mxu0 %v1395
      %1556 = vmatpush.msra.mxu0 %v1393
      %1557 = vmatpush.msra.mxu0 %v1391
      %1558 = vmatpush.msra.mxu0 %v1389
      %1559 = vmatpush.msra.mxu0 %v1387
      %1560 = vmatpush.msra.mxu0 %v1385
      %1561 = vmatmul.f32.gmra.mxu0 1.0
      %v1562 = vpop.f32.mrf.mxu0
      %v1563 = vadd.f32 0.0, %v1562
      %1564 = vdwg.mxu0
      %1565 = vmatpush.msra.mxu0 0.0
      %1566 = vmatpush.msra.mxu0 0.0
      %1567 = vmatpush.msra.mxu0 0.0
      %1568 = vmatpush.msra.mxu0 0.0
      %1569 = vmatpush.msra.mxu0 0.0
      %1570 = vmatpush.msra.mxu0 0.0
      %1571 = vmatpush.msra.mxu0 0.0
      %1572 = vmatpush.msra.mxu0 %v1540
      %1573 = vmatpush.msra.mxu0 %v1431
      %1574 = vmatpush.msra.mxu0 %v1429
      %1575 = vmatpush.msra.mxu0 %v1427
      %1576 = vmatpush.msra.mxu0 %v1425
      %1577 = vmatpush.msra.mxu0 %v1423
      %1578 = vmatpush.msra.mxu0 %v1421
      %1579 = vmatpush.msra.mxu0 %v1419
      %1580 = vmatpush.msra.mxu0 %v1417
      %1581 = vmatmul.f32.gmra.mxu0 %v1537
      %v1582 = vpop.f32.mrf.mxu0
      %v1583 = vadd.f32 %v1563, %v1582
      %1584 = vdwg.mxu0
      %1585 = vmatpush.msra.mxu0 %v1416
      %1586 = vmatpush.msra.mxu0 %v1414
      %1587 = vmatpush.msra.mxu0 %v1412
      %1588 = vmatpush.msra.mxu0 %v1410
      %1589 = vmatpush.msra.mxu0 %v1408
      %1590 = vmatpush.msra.mxu0 %v1406
      %1591 = vmatpush.msra.mxu0 %v1404
      %1592 = vmatpush.msra.mxu0 %v1402
      %1593 = vmatpush.msra.mxu0 %v1400
      %1594 = vmatpush.msra.mxu0 %v1398
      %1595 = vmatpush.msra.mxu0 %v1396
      %1596 = vmatpush.msra.mxu0 %v1394
      %1597 = vmatpush.msra.mxu0 %v1392
      %1598 = vmatpush.msra.mxu0 %v1390
      %1599 = vmatpush.msra.mxu0 %v1388
      %1600 = vmatpush.msra.mxu0 %v1386
      %1601 = vmatmul.f32.gmra.mxu0 1.0
      %v1602 = vpop.f32.mrf.mxu0
      %v1603 = vadd.f32 0.0, %v1602
      %1604 = vdwg.mxu0
      %1605 = vmatpush.msra.mxu0 0.0
      %1606 = vmatpush.msra.mxu0 0.0
      %1607 = vmatpush.msra.mxu0 0.0
      %1608 = vmatpush.msra.mxu0 0.0
      %1609 = vmatpush.msra.mxu0 0.0
      %1610 = vmatpush.msra.mxu0 0.0
      %1611 = vmatpush.msra.mxu0 0.0
      %1612 = vmatpush.msra.mxu0 %v1543
      %1613 = vmatpush.msra.mxu0 %v1432
      %1614 = vmatpush.msra.mxu0 %v1430
      %1615 = vmatpush.msra.mxu0 %v1428
      %1616 = vmatpush.msra.mxu0 %v1426
      %1617 = vmatpush.msra.mxu0 %v1424
      %1618 = vmatpush.msra.mxu0 %v1422
      %1619 = vmatpush.msra.mxu0 %v1420
      %1620 = vmatpush.msra.mxu0 %v1418
      %1621 = vmatmul.f32.gmra.mxu0 %v1537
      %v1622 = vpop.f32.mrf.mxu0
      %v1623 = vadd.f32 %v1603, %v1622
      %1624 = vdwg.mxu0
      %vm1625 = vcmp.lt.f32.partialorder %v1438, 1e-12
      %vm1626 = vcmp.lt.f32.partialorder %v1442, 1e-12
      %vm1627 = vcmp.lt.f32.partialorder %v1446, 1e-12
      %vm1628 = vcmp.lt.f32.partialorder %v1450, 1e-12
      %vm1629 = vcmp.lt.f32.partialorder %v1454, 1e-12
      %vm1630 = vcmp.lt.f32.partialorder %v1458, 1e-12
      %vm1631 = vcmp.lt.f32.partialorder %v1462, 1e-12
      %vm1632 = vcmp.lt.f32.partialorder %v1466, 1e-12
      %vm1633 = vcmp.lt.f32.partialorder %v1470, 1e-12
      %vm1634 = vcmp.lt.f32.partialorder %v1474, 1e-12
      %vm1635 = vcmp.lt.f32.partialorder %v1478, 1e-12
      %vm1636 = vcmp.lt.f32.partialorder %v1482, 1e-12
      %vm1637 = vcmp.lt.f32.partialorder %v1486, 1e-12
      %vm1638 = vcmp.lt.f32.partialorder %v1490, 1e-12
      %vm1639 = vcmp.lt.f32.partialorder %v1494, 1e-12
      %vm1640 = vcmp.lt.f32.partialorder %v1498, 1e-12
      %vm1641 = vcmp.lt.f32.partialorder %v1502, 1e-12
      %vm1642 = vcmp.lt.f32.partialorder %v1506, 1e-12
      %vm1643 = vcmp.lt.f32.partialorder %v1510, 1e-12
      %vm1644 = vcmp.lt.f32.partialorder %v1514, 1e-12
      %vm1645 = vcmp.lt.f32.partialorder %v1518, 1e-12
      %vm1646 = vcmp.lt.f32.partialorder %v1522, 1e-12
      %vm1647 = vcmp.lt.f32.partialorder %v1526, 1e-12
      %vm1648 = vcmp.lt.f32.partialorder %v1530, 1e-12
      %vm1649 = vcmp.lt.f32.partialorder %v1535, 1e-12
      %v1650 = vsel %vm1625, 1.0, %v1438
      %v1651 = vsel %vm1626, 1.0, %v1442
      %v1652 = vsel %vm1627, 1.0, %v1446
      %v1653 = vsel %vm1628, 1.0, %v1450
      %v1654 = vsel %vm1629, 1.0, %v1454
      %v1655 = vsel %vm1630, 1.0, %v1458
      %v1656 = vsel %vm1631, 1.0, %v1462
      %v1657 = vsel %vm1632, 1.0, %v1466
      %v1658 = vsel %vm1633, 1.0, %v1470
      %v1659 = vsel %vm1634, 1.0, %v1474
      %v1660 = vsel %vm1635, 1.0, %v1478
      %v1661 = vsel %vm1636, 1.0, %v1482
      %v1662 = vsel %vm1637, 1.0, %v1486
      %v1663 = vsel %vm1638, 1.0, %v1490
      %v1664 = vsel %vm1639, 1.0, %v1494
      %v1665 = vsel %vm1640, 1.0, %v1498
      %v1666 = vsel %vm1641, 1.0, %v1502
      %v1667 = vsel %vm1642, 1.0, %v1506
      %v1668 = vsel %vm1643, 1.0, %v1510
      %v1669 = vsel %vm1644, 1.0, %v1514
      %v1670 = vsel %vm1645, 1.0, %v1518
      %v1671 = vsel %vm1646, 1.0, %v1522
      %v1672 = vsel %vm1647, 1.0, %v1526
      %v1673 = vsel %vm1648, 1.0, %v1530
      %v1674 = vsel %vm1649, 1.0, %v1535
      %v1675 = vrsqrt.pop %v1650
      %v1676 = vmul.f32 %v1675, %v1650
      %v1677 = vmul.f32 %v1676, %v1675
      %v1678 = vmul.f32 0.5, %v1677
      %v1679 = vsub.f32 1.5, %v1678
      %v1680 = vmul.f32 %v1675, %v1679
      %vm1681 = vweird.f32 %v1650
      %vm1682 = vweird.f32 %v1675
      %vm1683 = vmor %vm1681, %vm1682
      %v1684 = vsel %vm1683, %v1675, %v1680
      %v1685 = vrsqrt.pop %v1651
      %v1686 = vmul.f32 %v1685, %v1651
      %v1687 = vmul.f32 %v1686, %v1685
      %v1688 = vmul.f32 0.5, %v1687
      %v1689 = vsub.f32 1.5, %v1688
      %v1690 = vmul.f32 %v1685, %v1689
      %vm1691 = vweird.f32 %v1651
      %vm1692 = vweird.f32 %v1685
      %vm1693 = vmor %vm1691, %vm1692
      %v1694 = vsel %vm1693, %v1685, %v1690
      %v1695 = vrsqrt.pop %v1652
      %v1696 = vmul.f32 %v1695, %v1652
      %v1697 = vmul.f32 %v1696, %v1695
      %v1698 = vmul.f32 0.5, %v1697
      %v1699 = vsub.f32 1.5, %v1698
      %v1700 = vmul.f32 %v1695, %v1699
      %vm1701 = vweird.f32 %v1652
      %vm1702 = vweird.f32 %v1695
      %vm1703 = vmor %vm1701, %vm1702
      %v1704 = vsel %vm1703, %v1695, %v1700
      %v1705 = vrsqrt.pop %v1653
      %v1706 = vmul.f32 %v1705, %v1653
      %v1707 = vmul.f32 %v1706, %v1705
      %v1708 = vmul.f32 0.5, %v1707
      %v1709 = vsub.f32 1.5, %v1708
      %v1710 = vmul.f32 %v1705, %v1709
      %vm1711 = vweird.f32 %v1653
      %vm1712 = vweird.f32 %v1705
      %vm1713 = vmor %vm1711, %vm1712
      %v1714 = vsel %vm1713, %v1705, %v1710
      %v1715 = vrsqrt.pop %v1654
      %v1716 = vmul.f32 %v1715, %v1654
      %v1717 = vmul.f32 %v1716, %v1715
      %v1718 = vmul.f32 0.5, %v1717
      %v1719 = vsub.f32 1.5, %v1718
      %v1720 = vmul.f32 %v1715, %v1719
      %vm1721 = vweird.f32 %v1654
      %vm1722 = vweird.f32 %v1715
      %vm1723 = vmor %vm1721, %vm1722
      %v1724 = vsel %vm1723, %v1715, %v1720
      %v1725 = vrsqrt.pop %v1655
      %v1726 = vmul.f32 %v1725, %v1655
      %v1727 = vmul.f32 %v1726, %v1725
      %v1728 = vmul.f32 0.5, %v1727
      %v1729 = vsub.f32 1.5, %v1728
      %v1730 = vmul.f32 %v1725, %v1729
      %vm1731 = vweird.f32 %v1655
      %vm1732 = vweird.f32 %v1725
      %vm1733 = vmor %vm1731, %vm1732
      %v1734 = vsel %vm1733, %v1725, %v1730
      %v1735 = vrsqrt.pop %v1656
      %v1736 = vmul.f32 %v1735, %v1656
      %v1737 = vmul.f32 %v1736, %v1735
      %v1738 = vmul.f32 0.5, %v1737
      %v1739 = vsub.f32 1.5, %v1738
      %v1740 = vmul.f32 %v1735, %v1739
      %vm1741 = vweird.f32 %v1656
      %vm1742 = vweird.f32 %v1735
      %vm1743 = vmor %vm1741, %vm1742
      %v1744 = vsel %vm1743, %v1735, %v1740
      %v1745 = vrsqrt.pop %v1657
      %v1746 = vmul.f32 %v1745, %v1657
      %v1747 = vmul.f32 %v1746, %v1745
      %v1748 = vmul.f32 0.5, %v1747
      %v1749 = vsub.f32 1.5, %v1748
      %v1750 = vmul.f32 %v1745, %v1749
      %vm1751 = vweird.f32 %v1657
      %vm1752 = vweird.f32 %v1745
      %vm1753 = vmor %vm1751, %vm1752
      %v1754 = vsel %vm1753, %v1745, %v1750
      %v1755 = vrsqrt.pop %v1658
      %v1756 = vmul.f32 %v1755, %v1658
      %v1757 = vmul.f32 %v1756, %v1755
      %v1758 = vmul.f32 0.5, %v1757
      %v1759 = vsub.f32 1.5, %v1758
      %v1760 = vmul.f32 %v1755, %v1759
      %vm1761 = vweird.f32 %v1658
      %vm1762 = vweird.f32 %v1755
      %vm1763 = vmor %vm1761, %vm1762
      %v1764 = vsel %vm1763, %v1755, %v1760
      %v1765 = vrsqrt.pop %v1659
      %v1766 = vmul.f32 %v1765, %v1659
      %v1767 = vmul.f32 %v1766, %v1765
      %v1768 = vmul.f32 0.5, %v1767
      %v1769 = vsub.f32 1.5, %v1768
      %v1770 = vmul.f32 %v1765, %v1769
      %vm1771 = vweird.f32 %v1659
      %vm1772 = vweird.f32 %v1765
      %vm1773 = vmor %vm1771, %vm1772
      %v1774 = vsel %vm1773, %v1765, %v1770
      %v1775 = vrsqrt.pop %v1660
      %v1776 = vmul.f32 %v1775, %v1660
      %v1777 = vmul.f32 %v1776, %v1775
      %v1778 = vmul.f32 0.5, %v1777
      %v1779 = vsub.f32 1.5, %v1778
      %v1780 = vmul.f32 %v1775, %v1779
      %vm1781 = vweird.f32 %v1660
      %vm1782 = vweird.f32 %v1775
      %vm1783 = vmor %vm1781, %vm1782
      %v1784 = vsel %vm1783, %v1775, %v1780
      %v1785 = vrsqrt.pop %v1661
      %v1786 = vmul.f32 %v1785, %v1661
      %v1787 = vmul.f32 %v1786, %v1785
      %v1788 = vmul.f32 0.5, %v1787
      %v1789 = vsub.f32 1.5, %v1788
      %v1790 = vmul.f32 %v1785, %v1789
      %vm1791 = vweird.f32 %v1661
      %vm1792 = vweird.f32 %v1785
      %vm1793 = vmor %vm1791, %vm1792
      %v1794 = vsel %vm1793, %v1785, %v1790
      %v1795 = vrsqrt.pop %v1662
      %v1796 = vmul.f32 %v1795, %v1662
      %v1797 = vmul.f32 %v1796, %v1795
      %v1798 = vmul.f32 0.5, %v1797
      %v1799 = vsub.f32 1.5, %v1798
      %v1800 = vmul.f32 %v1795, %v1799
      %vm1801 = vweird.f32 %v1662
      %vm1802 = vweird.f32 %v1795
      %vm1803 = vmor %vm1801, %vm1802
      %v1804 = vsel %vm1803, %v1795, %v1800
      %v1805 = vrsqrt.pop %v1663
      %v1806 = vmul.f32 %v1805, %v1663
      %v1807 = vmul.f32 %v1806, %v1805
      %v1808 = vmul.f32 0.5, %v1807
      %v1809 = vsub.f32 1.5, %v1808
      %v1810 = vmul.f32 %v1805, %v1809
      %vm1811 = vweird.f32 %v1663
      %vm1812 = vweird.f32 %v1805
      %vm1813 = vmor %vm1811, %vm1812
      %v1814 = vsel %vm1813, %v1805, %v1810
      %v1815 = vrsqrt.pop %v1664
      %v1816 = vmul.f32 %v1815, %v1664
      %v1817 = vmul.f32 %v1816, %v1815
      %v1818 = vmul.f32 0.5, %v1817
      %v1819 = vsub.f32 1.5, %v1818
      %v1820 = vmul.f32 %v1815, %v1819
      %vm1821 = vweird.f32 %v1664
      %vm1822 = vweird.f32 %v1815
      %vm1823 = vmor %vm1821, %vm1822
      %v1824 = vsel %vm1823, %v1815, %v1820
      %v1825 = vrsqrt.pop %v1665
      %v1826 = vmul.f32 %v1825, %v1665
      %v1827 = vmul.f32 %v1826, %v1825
      %v1828 = vmul.f32 0.5, %v1827
      %v1829 = vsub.f32 1.5, %v1828
      %v1830 = vmul.f32 %v1825, %v1829
      %vm1831 = vweird.f32 %v1665
      %vm1832 = vweird.f32 %v1825
      %vm1833 = vmor %vm1831, %vm1832
      %v1834 = vsel %vm1833, %v1825, %v1830
      %v1835 = vrsqrt.pop %v1666
      %v1836 = vmul.f32 %v1835, %v1666
      %v1837 = vmul.f32 %v1836, %v1835
      %v1838 = vmul.f32 0.5, %v1837
      %v1839 = vsub.f32 1.5, %v1838
      %v1840 = vmul.f32 %v1835, %v1839
      %vm1841 = vweird.f32 %v1666
      %vm1842 = vweird.f32 %v1835
      %vm1843 = vmor %vm1841, %vm1842
      %v1844 = vsel %vm1843, %v1835, %v1840
      %v1845 = vrsqrt.pop %v1667
      %v1846 = vmul.f32 %v1845, %v1667
      %v1847 = vmul.f32 %v1846, %v1845
      %v1848 = vmul.f32 0.5, %v1847
      %v1849 = vsub.f32 1.5, %v1848
      %v1850 = vmul.f32 %v1845, %v1849
      %vm1851 = vweird.f32 %v1667
      %vm1852 = vweird.f32 %v1845
      %vm1853 = vmor %vm1851, %vm1852
      %v1854 = vsel %vm1853, %v1845, %v1850
      %v1855 = vrsqrt.pop %v1668
      %v1856 = vmul.f32 %v1855, %v1668
      %v1857 = vmul.f32 %v1856, %v1855
      %v1858 = vmul.f32 0.5, %v1857
      %v1859 = vsub.f32 1.5, %v1858
      %v1860 = vmul.f32 %v1855, %v1859
      %vm1861 = vweird.f32 %v1668
      %vm1862 = vweird.f32 %v1855
      %vm1863 = vmor %vm1861, %vm1862
      %v1864 = vsel %vm1863, %v1855, %v1860
      %v1865 = vrsqrt.pop %v1669
      %v1866 = vmul.f32 %v1865, %v1669
      %v1867 = vmul.f32 %v1866, %v1865
      %v1868 = vmul.f32 0.5, %v1867
      %v1869 = vsub.f32 1.5, %v1868
      %v1870 = vmul.f32 %v1865, %v1869
      %vm1871 = vweird.f32 %v1669
      %vm1872 = vweird.f32 %v1865
      %vm1873 = vmor %vm1871, %vm1872
      %v1874 = vsel %vm1873, %v1865, %v1870
      %v1875 = vrsqrt.pop %v1670
      %v1876 = vmul.f32 %v1875, %v1670
      %v1877 = vmul.f32 %v1876, %v1875
      %v1878 = vmul.f32 0.5, %v1877
      %v1879 = vsub.f32 1.5, %v1878
      %v1880 = vmul.f32 %v1875, %v1879
      %vm1881 = vweird.f32 %v1670
      %vm1882 = vweird.f32 %v1875
      %vm1883 = vmor %vm1881, %vm1882
      %v1884 = vsel %vm1883, %v1875, %v1880
      %v1885 = vrsqrt.pop %v1671
      %v1886 = vmul.f32 %v1885, %v1671
      %v1887 = vmul.f32 %v1886, %v1885
      %v1888 = vmul.f32 0.5, %v1887
      %v1889 = vsub.f32 1.5, %v1888
      %v1890 = vmul.f32 %v1885, %v1889
      %vm1891 = vweird.f32 %v1671
      %vm1892 = vweird.f32 %v1885
      %vm1893 = vmor %vm1891, %vm1892
      %v1894 = vsel %vm1893, %v1885, %v1890
      %v1895 = vrsqrt.pop %v1672
      %v1896 = vmul.f32 %v1895, %v1672
      %v1897 = vmul.f32 %v1896, %v1895
      %v1898 = vmul.f32 0.5, %v1897
      %v1899 = vsub.f32 1.5, %v1898
      %v1900 = vmul.f32 %v1895, %v1899
      %vm1901 = vweird.f32 %v1672
      %vm1902 = vweird.f32 %v1895
      %vm1903 = vmor %vm1901, %vm1902
      %v1904 = vsel %vm1903, %v1895, %v1900
      %v1905 = vrsqrt.pop %v1673
      %v1906 = vmul.f32 %v1905, %v1673
      %v1907 = vmul.f32 %v1906, %v1905
      %v1908 = vmul.f32 0.5, %v1907
      %v1909 = vsub.f32 1.5, %v1908
      %v1910 = vmul.f32 %v1905, %v1909
      %vm1911 = vweird.f32 %v1673
      %vm1912 = vweird.f32 %v1905
      %vm1913 = vmor %vm1911, %vm1912
      %v1914 = vsel %vm1913, %v1905, %v1910
      %v1915 = vrsqrt.pop %v1674
      %v1916 = vmul.f32 %v1915, %v1674
      %v1917 = vmul.f32 %v1916, %v1915
      %v1918 = vmul.f32 0.5, %v1917
      %v1919 = vsub.f32 1.5, %v1918
      %v1920 = vmul.f32 %v1915, %v1919
      %vm1921 = vweird.f32 %v1674
      %vm1922 = vweird.f32 %v1915
      %vm1923 = vmor %vm1921, %vm1922
      %v1924 = vsel %vm1923, %v1915, %v1920
      %vm1925 = vcmp.lt.f32.partialorder %v1583, 1e-12
      %vm1926 = vcmp.lt.f32.partialorder %v1623, 1e-12
      %v1927 = vsel %vm1925, 1.0, %v1583
      %v1928 = vsel %vm1926, 1.0, %v1623
      %v1929 = vrsqrt.pop %v1927
      %v1930 = vmul.f32 %v1929, %v1927
      %v1931 = vmul.f32 %v1930, %v1929
      %v1932 = vmul.f32 0.5, %v1931
      %v1933 = vsub.f32 1.5, %v1932
      %v1934 = vmul.f32 %v1929, %v1933
      %vm1935 = vweird.f32 %v1927
      %vm1936 = vweird.f32 %v1929
      %vm1937 = vmor %vm1935, %vm1936
      %v1938 = vsel %vm1937, %v1929, %v1934
      %v1939 = vrsqrt.pop %v1928
      %v1940 = vmul.f32 %v1939, %v1928
      %v1941 = vmul.f32 %v1940, %v1939
      %v1942 = vmul.f32 0.5, %v1941
      %v1943 = vsub.f32 1.5, %v1942
      %v1944 = vmul.f32 %v1939, %v1943
      %vm1945 = vweird.f32 %v1928
      %vm1946 = vweird.f32 %v1939
      %vm1947 = vmor %vm1945, %vm1946
      %v1948 = vsel %vm1947, %v1939, %v1944
      %v1949 = vlaneseq
      %v1950 = vshrl.u32 %v1949, 7
      %v1951 = vadd.s32 %v1950, 8
      %v1952 = vadd.s32 %v1950, 16
      %v1953 = vadd.s32 %v1950, 24
      %v1954 = vadd.s32 %v1950, 32
      %v1955 = vadd.s32 %v1950, 40
      %v1956 = vadd.s32 %v1950, 48
      %v1957 = vadd.s32 %v1950, 56
      %v1958 = vadd.s32 %v1950, 64
      %v1959 = vadd.s32 %v1950, 72
      %v1960 = vadd.s32 %v1950, 80
      %v1961 = vadd.s32 %v1950, 88
      %v1962 = vadd.s32 %v1950, 96
      %v1963 = vadd.s32 %v1950, 104
      %v1964 = vadd.s32 %v1950, 112
      %v1965 = vadd.s32 %v1950, 120
      %v1966 = vadd.s32 %v1950, 128
      %v1967 = vadd.s32 %v1950, 136
      %v1968 = vadd.s32 %v1950, 144
      %v1969 = vadd.s32 %v1950, 152
      %v1970 = vadd.s32 %v1950, 160
      %v1971 = vadd.s32 %v1950, 168
      %v1972 = vadd.s32 %v1950, 176
      %v1973 = vadd.s32 %v1950, 184
      %v1974 = vadd.s32 %v1950, 192
      %v1975 = vlaneseq
      %v1976 = vand.u32 %v1975, 127
      %v1977 = vadd.s32 %v1976, 128
      %vm1978 = vcmp.eq.s32.totalorder %v1950, %v1976
      %vm1979 = vcmp.eq.s32.totalorder %v1950, %v1977
      %vm1980 = vcmp.eq.s32.totalorder %v1951, %v1976
      %vm1981 = vcmp.eq.s32.totalorder %v1951, %v1977
      %vm1982 = vcmp.eq.s32.totalorder %v1952, %v1976
      %vm1983 = vcmp.eq.s32.totalorder %v1952, %v1977
      %vm1984 = vcmp.eq.s32.totalorder %v1953, %v1976
      %vm1985 = vcmp.eq.s32.totalorder %v1953, %v1977
      %vm1986 = vcmp.eq.s32.totalorder %v1954, %v1976
      %vm1987 = vcmp.eq.s32.totalorder %v1954, %v1977
      %vm1988 = vcmp.eq.s32.totalorder %v1955, %v1976
      %vm1989 = vcmp.eq.s32.totalorder %v1955, %v1977
      %vm1990 = vcmp.eq.s32.totalorder %v1956, %v1976
      %vm1991 = vcmp.eq.s32.totalorder %v1956, %v1977
      %vm1992 = vcmp.eq.s32.totalorder %v1957, %v1976
      %vm1993 = vcmp.eq.s32.totalorder %v1957, %v1977
      %vm1994 = vcmp.eq.s32.totalorder %v1958, %v1976
      %vm1995 = vcmp.eq.s32.totalorder %v1958, %v1977
      %vm1996 = vcmp.eq.s32.totalorder %v1959, %v1976
      %vm1997 = vcmp.eq.s32.totalorder %v1959, %v1977
      %vm1998 = vcmp.eq.s32.totalorder %v1960, %v1976
      %vm1999 = vcmp.eq.s32.totalorder %v1960, %v1977
      %vm2000 = vcmp.eq.s32.totalorder %v1961, %v1976
      %vm2001 = vcmp.eq.s32.totalorder %v1961, %v1977
      %vm2002 = vcmp.eq.s32.totalorder %v1962, %v1976
      %vm2003 = vcmp.eq.s32.totalorder %v1962, %v1977
      %vm2004 = vcmp.eq.s32.totalorder %v1963, %v1976
      %vm2005 = vcmp.eq.s32.totalorder %v1963, %v1977
      %vm2006 = vcmp.eq.s32.totalorder %v1964, %v1976
      %vm2007 = vcmp.eq.s32.totalorder %v1964, %v1977
      %vm2008 = vcmp.eq.s32.totalorder %v1965, %v1976
      %vm2009 = vcmp.eq.s32.totalorder %v1965, %v1977
      %vm2010 = vcmp.eq.s32.totalorder %v1966, %v1976
      %vm2011 = vcmp.eq.s32.totalorder %v1966, %v1977
      %vm2012 = vcmp.eq.s32.totalorder %v1967, %v1976
      %vm2013 = vcmp.eq.s32.totalorder %v1967, %v1977
      %vm2014 = vcmp.eq.s32.totalorder %v1968, %v1976
      %vm2015 = vcmp.eq.s32.totalorder %v1968, %v1977
      %vm2016 = vcmp.eq.s32.totalorder %v1969, %v1976
      %vm2017 = vcmp.eq.s32.totalorder %v1969, %v1977
      %vm2018 = vcmp.eq.s32.totalorder %v1970, %v1976
      %vm2019 = vcmp.eq.s32.totalorder %v1970, %v1977
      %vm2020 = vcmp.eq.s32.totalorder %v1971, %v1976
      %vm2021 = vcmp.eq.s32.totalorder %v1971, %v1977
      %vm2022 = vcmp.eq.s32.totalorder %v1972, %v1976
      %vm2023 = vcmp.eq.s32.totalorder %v1972, %v1977
      %vm2024 = vcmp.eq.s32.totalorder %v1973, %v1976
      %vm2025 = vcmp.eq.s32.totalorder %v1973, %v1977
      %vm2026 = vcmp.eq.s32.totalorder %v1974, %v1976
      %vm2027 = vcmp.eq.s32.totalorder %v1974, %v1977
      %v2028 = vsel %vm1978, 1.0, 0.0
      %v2029 = vsel %vm1979, 1.0, 0.0
      %v2030 = vsel %vm1980, 1.0, 0.0
      %v2031 = vsel %vm1981, 1.0, 0.0
      %v2032 = vsel %vm1982, 1.0, 0.0
      %v2033 = vsel %vm1983, 1.0, 0.0
      %v2034 = vsel %vm1984, 1.0, 0.0
      %v2035 = vsel %vm1985, 1.0, 0.0
      %v2036 = vsel %vm1986, 1.0, 0.0
      %v2037 = vsel %vm1987, 1.0, 0.0
      %v2038 = vsel %vm1988, 1.0, 0.0
      %v2039 = vsel %vm1989, 1.0, 0.0
      %v2040 = vsel %vm1990, 1.0, 0.0
      %v2041 = vsel %vm1991, 1.0, 0.0
      %v2042 = vsel %vm1992, 1.0, 0.0
      %v2043 = vsel %vm1993, 1.0, 0.0
      %v2044 = vsel %vm1994, 1.0, 0.0
      %v2045 = vsel %vm1995, 1.0, 0.0
      %v2046 = vsel %vm1996, 1.0, 0.0
      %v2047 = vsel %vm1997, 1.0, 0.0
      %v2048 = vsel %vm1998, 1.0, 0.0
      %v2049 = vsel %vm1999, 1.0, 0.0
      %v2050 = vsel %vm2000, 1.0, 0.0
      %v2051 = vsel %vm2001, 1.0, 0.0
      %v2052 = vsel %vm2002, 1.0, 0.0
      %v2053 = vsel %vm2003, 1.0, 0.0
      %v2054 = vsel %vm2004, 1.0, 0.0
      %v2055 = vsel %vm2005, 1.0, 0.0
      %v2056 = vsel %vm2006, 1.0, 0.0
      %v2057 = vsel %vm2007, 1.0, 0.0
      %v2058 = vsel %vm2008, 1.0, 0.0
      %v2059 = vsel %vm2009, 1.0, 0.0
      %v2060 = vsel %vm2010, 1.0, 0.0
      %v2061 = vsel %vm2011, 1.0, 0.0
      %v2062 = vsel %vm2012, 1.0, 0.0
      %v2063 = vsel %vm2013, 1.0, 0.0
      %v2064 = vsel %vm2014, 1.0, 0.0
      %v2065 = vsel %vm2015, 1.0, 0.0
      %v2066 = vsel %vm2016, 1.0, 0.0
      %v2067 = vsel %vm2017, 1.0, 0.0
      %v2068 = vsel %vm2018, 1.0, 0.0
      %v2069 = vsel %vm2019, 1.0, 0.0
      %v2070 = vsel %vm2020, 1.0, 0.0
      %v2071 = vsel %vm2021, 1.0, 0.0
      %v2072 = vsel %vm2022, 1.0, 0.0
      %v2073 = vsel %vm2023, 1.0, 0.0
      %v2074 = vsel %vm2024, 1.0, 0.0
      %v2075 = vsel %vm2025, 1.0, 0.0
      %v2076 = vsel %vm2026, 1.0, 0.0
      %v2077 = vsel %vm2027, 1.0, 0.0
      %v2078 = vmul.f32 %v1385, %v1684
      %v2079 = vmul.f32 %v1386, %v1684
      %v2080 = vmul.f32 %v1387, %v1694
      %v2081 = vmul.f32 %v1388, %v1694
      %v2082 = vmul.f32 %v1389, %v1704
      %v2083 = vmul.f32 %v1390, %v1704
      %v2084 = vmul.f32 %v1391, %v1714
      %v2085 = vmul.f32 %v1392, %v1714
      %v2086 = vmul.f32 %v1393, %v1724
      %v2087 = vmul.f32 %v1394, %v1724
      %v2088 = vmul.f32 %v1395, %v1734
      %v2089 = vmul.f32 %v1396, %v1734
      %v2090 = vmul.f32 %v1397, %v1744
      %v2091 = vmul.f32 %v1398, %v1744
      %v2092 = vmul.f32 %v1399, %v1754
      %v2093 = vmul.f32 %v1400, %v1754
      %v2094 = vmul.f32 %v1401, %v1764
      %v2095 = vmul.f32 %v1402, %v1764
      %v2096 = vmul.f32 %v1403, %v1774
      %v2097 = vmul.f32 %v1404, %v1774
      %v2098 = vmul.f32 %v1405, %v1784
      %v2099 = vmul.f32 %v1406, %v1784
      %v2100 = vmul.f32 %v1407, %v1794
      %v2101 = vmul.f32 %v1408, %v1794
      %v2102 = vmul.f32 %v1409, %v1804
      %v2103 = vmul.f32 %v1410, %v1804
      %v2104 = vmul.f32 %v1411, %v1814
      %v2105 = vmul.f32 %v1412, %v1814
      %v2106 = vmul.f32 %v1413, %v1824
      %v2107 = vmul.f32 %v1414, %v1824
      %v2108 = vmul.f32 %v1415, %v1834
      %v2109 = vmul.f32 %v1416, %v1834
      %v2110 = vmul.f32 %v1417, %v1844
      %v2111 = vmul.f32 %v1418, %v1844
      %v2112 = vmul.f32 %v1419, %v1854
      %v2113 = vmul.f32 %v1420, %v1854
      %v2114 = vmul.f32 %v1421, %v1864
      %v2115 = vmul.f32 %v1422, %v1864
      %v2116 = vmul.f32 %v1423, %v1874
      %v2117 = vmul.f32 %v1424, %v1874
      %v2118 = vmul.f32 %v1425, %v1884
      %v2119 = vmul.f32 %v1426, %v1884
      %v2120 = vmul.f32 %v1427, %v1894
      %v2121 = vmul.f32 %v1428, %v1894
      %v2122 = vmul.f32 %v1429, %v1904
      %v2123 = vmul.f32 %v1430, %v1904
      %v2124 = vmul.f32 %v1431, %v1914
      %v2125 = vmul.f32 %v1432, %v1914
      %v2126 = vmul.f32 %v1433, %v1924
      %v2127 = vmul.f32 %v1434, %v1924
      %v2128 = vperm.slane %v1938, 0
      %v2129 = vperm.slane %v1948, 0
      %v2130 = vmul.f32 %v2078, %v2128
      %v2131 = vmul.f32 %v2079, %v2129
      %v2132 = vmul.f32 %v2080, %v2128
      %v2133 = vmul.f32 %v2081, %v2129
      %v2134 = vmul.f32 %v2082, %v2128
      %v2135 = vmul.f32 %v2083, %v2129
      %v2136 = vmul.f32 %v2084, %v2128
      %v2137 = vmul.f32 %v2085, %v2129
      %v2138 = vmul.f32 %v2086, %v2128
      %v2139 = vmul.f32 %v2087, %v2129
      %v2140 = vmul.f32 %v2088, %v2128
      %v2141 = vmul.f32 %v2089, %v2129
      %v2142 = vmul.f32 %v2090, %v2128
      %v2143 = vmul.f32 %v2091, %v2129
      %v2144 = vmul.f32 %v2092, %v2128
      %v2145 = vmul.f32 %v2093, %v2129
      %v2146 = vmul.f32 %v2094, %v2128
      %v2147 = vmul.f32 %v2095, %v2129
      %v2148 = vmul.f32 %v2096, %v2128
      %v2149 = vmul.f32 %v2097, %v2129
      %v2150 = vmul.f32 %v2098, %v2128
      %v2151 = vmul.f32 %v2099, %v2129
      %v2152 = vmul.f32 %v2100, %v2128
      %v2153 = vmul.f32 %v2101, %v2129
      %v2154 = vmul.f32 %v2102, %v2128
      %v2155 = vmul.f32 %v2103, %v2129
      %v2156 = vmul.f32 %v2104, %v2128
      %v2157 = vmul.f32 %v2105, %v2129
      %v2158 = vmul.f32 %v2106, %v2128
      %v2159 = vmul.f32 %v2107, %v2129
      %v2160 = vmul.f32 %v2108, %v2128
      %v2161 = vmul.f32 %v2109, %v2129
      %v2162 = vmul.f32 %v2110, %v2128
      %v2163 = vmul.f32 %v2111, %v2129
      %v2164 = vmul.f32 %v2112, %v2128
      %v2165 = vmul.f32 %v2113, %v2129
      %v2166 = vmul.f32 %v2114, %v2128
      %v2167 = vmul.f32 %v2115, %v2129
      %v2168 = vmul.f32 %v2116, %v2128
      %v2169 = vmul.f32 %v2117, %v2129
      %v2170 = vmul.f32 %v2118, %v2128
      %v2171 = vmul.f32 %v2119, %v2129
      %v2172 = vmul.f32 %v2120, %v2128
      %v2173 = vmul.f32 %v2121, %v2129
      %v2174 = vmul.f32 %v2122, %v2128
      %v2175 = vmul.f32 %v2123, %v2129
      %v2176 = vmul.f32 %v2124, %v2128
      %v2177 = vmul.f32 %v2125, %v2129
      %v2178 = vmul.f32 %v2126, %v2128
      %v2179 = vmul.f32 %v2127, %v2129
      %v2180 = vsub.f32 %v2028, %v2130
      %v2181 = vsub.f32 %v2029, %v2131
      %v2182 = vsub.f32 %v2030, %v2132
      %v2183 = vsub.f32 %v2031, %v2133
      %v2184 = vsub.f32 %v2032, %v2134
      %v2185 = vsub.f32 %v2033, %v2135
      %v2186 = vsub.f32 %v2034, %v2136
      %v2187 = vsub.f32 %v2035, %v2137
      %v2188 = vsub.f32 %v2036, %v2138
      %v2189 = vsub.f32 %v2037, %v2139
      %v2190 = vsub.f32 %v2038, %v2140
      %v2191 = vsub.f32 %v2039, %v2141
      %v2192 = vsub.f32 %v2040, %v2142
      %v2193 = vsub.f32 %v2041, %v2143
      %v2194 = vsub.f32 %v2042, %v2144
      %v2195 = vsub.f32 %v2043, %v2145
      %v2196 = vsub.f32 %v2044, %v2146
      %v2197 = vsub.f32 %v2045, %v2147
      %v2198 = vsub.f32 %v2046, %v2148
      %v2199 = vsub.f32 %v2047, %v2149
      %v2200 = vsub.f32 %v2048, %v2150
      %v2201 = vsub.f32 %v2049, %v2151
      %v2202 = vsub.f32 %v2050, %v2152
      %v2203 = vsub.f32 %v2051, %v2153
      %v2204 = vsub.f32 %v2052, %v2154
      %v2205 = vsub.f32 %v2053, %v2155
      %v2206 = vsub.f32 %v2054, %v2156
      %v2207 = vsub.f32 %v2055, %v2157
      %v2208 = vsub.f32 %v2056, %v2158
      %v2209 = vsub.f32 %v2057, %v2159
      %v2210 = vsub.f32 %v2058, %v2160
      %v2211 = vsub.f32 %v2059, %v2161
      %v2212 = vsub.f32 %v2060, %v2162
      %v2213 = vsub.f32 %v2061, %v2163
      %v2214 = vsub.f32 %v2062, %v2164
      %v2215 = vsub.f32 %v2063, %v2165
      %v2216 = vsub.f32 %v2064, %v2166
      %v2217 = vsub.f32 %v2065, %v2167
      %v2218 = vsub.f32 %v2066, %v2168
      %v2219 = vsub.f32 %v2067, %v2169
      %v2220 = vsub.f32 %v2068, %v2170
      %v2221 = vsub.f32 %v2069, %v2171
      %v2222 = vsub.f32 %v2070, %v2172
      %v2223 = vsub.f32 %v2071, %v2173
      %v2224 = vsub.f32 %v2072, %v2174
      %v2225 = vsub.f32 %v2073, %v2175
      %v2226 = vsub.f32 %v2074, %v2176
      %v2227 = vsub.f32 %v2075, %v2177
      %v2228 = vsub.f32 %v2076, %v2178
      %v2229 = vsub.f32 %v2077, %v2179
      %2230 = vst [vmem:[%s163] sm:$0xff] %v2180
      %2231 = vst.msk [vmem:[%s163 + $0x8] sm:$0xff] %vm524, %v2181
      %2232 = vst [vmem:[%s163 + $0x10] sm:$0xff] %v2182
      %2233 = vst.msk [vmem:[%s163 + $0x18] sm:$0xff] %vm524, %v2183
      %2234 = vst [vmem:[%s163 + $0x20] sm:$0xff] %v2184
      %2235 = vst.msk [vmem:[%s163 + $0x28] sm:$0xff] %vm524, %v2185
      %2236 = vst [vmem:[%s163 + $0x30] sm:$0xff] %v2186
      %2237 = vst.msk [vmem:[%s163 + $0x38] sm:$0xff] %vm524, %v2187
      %2238 = vst [vmem:[%s163 + $0x40] sm:$0xff] %v2188
      %2239 = vst.msk [vmem:[%s163 + $0x48] sm:$0xff] %vm524, %v2189
      %2240 = vst [vmem:[%s163 + $0x50] sm:$0xff] %v2190
      %2241 = vst.msk [vmem:[%s163 + $0x58] sm:$0xff] %vm524, %v2191
      %2242 = vst [vmem:[%s163 + $0x60] sm:$0xff] %v2192
      %2243 = vst.msk [vmem:[%s163 + $0x68] sm:$0xff] %vm524, %v2193
      %2244 = vst [vmem:[%s163 + $0x70] sm:$0xff] %v2194
      %2245 = vst.msk [vmem:[%s163 + $0x78] sm:$0xff] %vm524, %v2195
      %2246 = vst [vmem:[%s163 + $0x80] sm:$0xff] %v2196
      %2247 = vst.msk [vmem:[%s163 + $0x88] sm:$0xff] %vm524, %v2197
      %2248 = vst [vmem:[%s163 + $0x90] sm:$0xff] %v2198
      %2249 = vst.msk [vmem:[%s163 + $0x98] sm:$0xff] %vm524, %v2199
      %2250 = vst [vmem:[%s163 + $0xa0] sm:$0xff] %v2200
      %2251 = vst.msk [vmem:[%s163 + $0xa8] sm:$0xff] %vm524, %v2201
      %2252 = vst [vmem:[%s163 + $0xb0] sm:$0xff] %v2202
      %2253 = vst.msk [vmem:[%s163 + $0xb8] sm:$0xff] %vm524, %v2203
      %2254 = vst [vmem:[%s163 + $0xc0] sm:$0xff] %v2204
      %2255 = vst.msk [vmem:[%s163 + $0xc8] sm:$0xff] %vm524, %v2205
      %2256 = vst [vmem:[%s163 + $0xd0] sm:$0xff] %v2206
      %2257 = vst.msk [vmem:[%s163 + $0xd8] sm:$0xff] %vm524, %v2207
      %2258 = vst [vmem:[%s163 + $0xe0] sm:$0xff] %v2208
      %2259 = vst.msk [vmem:[%s163 + $0xe8] sm:$0xff] %vm524, %v2209
      %2260 = vst [vmem:[%s163 + $0xf0] sm:$0xff] %v2210
      %2261 = vst.msk [vmem:[%s163 + $0xf8] sm:$0xff] %vm524, %v2211
      %2262 = vst [vmem:[%s163 + $0x100] sm:$0xff] %v2212
      %2263 = vst.msk [vmem:[%s163 + $0x108] sm:$0xff] %vm524, %v2213
      %2264 = vst [vmem:[%s163 + $0x110] sm:$0xff] %v2214
      %2265 = vst.msk [vmem:[%s163 + $0x118] sm:$0xff] %vm524, %v2215
      %2266 = vst [vmem:[%s163 + $0x120] sm:$0xff] %v2216
      %2267 = vst.msk [vmem:[%s163 + $0x128] sm:$0xff] %vm524, %v2217
      %2268 = vst [vmem:[%s163 + $0x130] sm:$0xff] %v2218
      %2269 = vst.msk [vmem:[%s163 + $0x138] sm:$0xff] %vm524, %v2219
      %2270 = vst [vmem:[%s163 + $0x140] sm:$0xff] %v2220
      %2271 = vst.msk [vmem:[%s163 + $0x148] sm:$0xff] %vm524, %v2221
      %2272 = vst [vmem:[%s163 + $0x150] sm:$0xff] %v2222
      %2273 = vst.msk [vmem:[%s163 + $0x158] sm:$0xff] %vm524, %v2223
      %2274 = vst [vmem:[%s163 + $0x160] sm:$0xff] %v2224
      %2275 = vst.msk [vmem:[%s163 + $0x168] sm:$0xff] %vm524, %v2225
      %2276 = vst [vmem:[%s163 + $0x170] sm:$0xff] %v2226
      %2277 = vst.msk [vmem:[%s163 + $0x178] sm:$0xff] %vm524, %v2227
      %2278 = vst [vmem:[%s163 + $0x180] sm:$0xf] %v2228
      %2279 = vst.msk [vmem:[%s163 + $0x188] sm:$0xf] %vm596, %v2229
      %p2280 = scmp.lt.s32.totalorder %s13, 1
      %s2281 = scalar_select %p2280, %s13, 1
      %s2282 = smul.addr %s2281, 50
      %s2283 = smul.addr %s2282, 8
      %s2284 = scalar_lea.vmem %s2, %s2283
      // Predicated region
      $region29: #{tpu_custom_call.1} parent=27 // pred_check
        %p2285 = pneg %p83
      $region30: #{tpu_custom_call.1} parent=27 // pred_check_branch
        %2287 = sbr.rel (%p2285) target = $region32
      $region31: #{tpu_custom_call.1} parent=27 // pred_region
        _
      $region32: #{tpu_custom_call.1} parent=27 // pred_fallthru
        _
    $region28: #{tpu_custom_call.1} parent=5 // pred_fallthru
      _
    %p2288 = scmp.le.s32.totalorder 2, %s8
    // Predicated region
    $region33: #{tpu_custom_call.1} parent=5 // pred_check
      %p2289 = pneg %p2288
    $region34: #{tpu_custom_call.1} parent=5 // pred_check_branch
      %2291 = sbr.rel (%p2289) target = $region36
    $region35: #{tpu_custom_call.1} parent=5 // pred_region
      %s2292 = ssub.s32 %s8, 2
      // Predicated region
      $region37: #{tpu_custom_call.1} parent=35 // pred_check
        %p2293 = pneg %p89
      $region38: #{tpu_custom_call.1} parent=35 // pred_check_branch
        %2295 = sbr.rel (%p2293) target = $region40
      $region39: #{tpu_custom_call.1} parent=35 // pred_region
        %p2296 = scmp.lt.s32.totalorder %s14, 1
        %s2297 = scalar_select %p2296, %s14, 1
        %s2298 = smul.addr %s2297, 50
        %s2299 = smul.addr %s2298, 8
        %s2300 = scalar_lea.vmem %s2, %s2299
      $region40: #{tpu_custom_call.1} parent=35 // pred_fallthru
        _
    $region36: #{tpu_custom_call.1} parent=5 // pred_fallthru
      _
  $region6: #{tpu_custom_call.1} parent=0 // loop_footer
    %s12 = sadd.s32 1, %s8
  $region7: #{tpu_custom_call.1} parent=0 // loop_footer_branch
    %7 = sbr.rel target = $region3
  $region8: #{tpu_custom_call.1} parent=0 // loop_exit
    _

</llo_original>
